<compile_context>
chip_gen: v5e
topology: v5e:2x2
jax: 0.10.0
libtpu: 0.0.40
codegen_flags: <defaults>
</compile_context>

<pallas_src>
import functools

import jax
import jax.numpy as jnp
import numpy as np
from jax.experimental import pallas as pl
from jax.experimental.pallas import tpu as pltpu


# ----------------------------------------------------------------------------
# Pallas kernel: flash-attention over spatial positions + W projection + skip.
# grid = (B, N // tq, N // tk); scratch persists across the ki axis.
# ----------------------------------------------------------------------------
def _nl_flash_kernel(theta_ref, phi_ref, g_ref, x_ref, ww_ref, bw_ref,
                     out_ref, m_sc, l_sc, acc_sc, *, exp_bf16):
    ki = pl.program_id(2)

    @pl.when(ki == 0)
    def _():
        m_sc[...] = jnp.full_like(m_sc, -jnp.inf)
        l_sc[...] = jnp.zeros_like(l_sc)
        acc_sc[...] = jnp.zeros_like(acc_sc)

    theta = theta_ref[0]          # (tq, Cp)  bf16
    phi = phi_ref[0]              # (Cp, tk)  bf16  (natural layout, no transpose)
    g = g_ref[0]                  # (tk, Cp)  bf16

    # s = theta @ phi : plain [tq,Cp] @ [Cp,tk] MXU matmul, fp32 accumulation.
    s = jnp.dot(theta, phi, preferred_element_type=jnp.float32)   # (tq, tk)

    # Online softmax update (fp32 statistics).
    m_prev = m_sc[...]                                            # (tq, 1)
    m_new = jnp.maximum(m_prev, jnp.max(s, axis=-1, keepdims=True))
    alpha = jnp.exp(m_prev - m_new)                               # (tq, 1) f32

    if exp_bf16:
        # v6e/v7x: exponential on the bf16 EUP path; p is fed to the MXU as
        # bf16 anyway, row-sum is accumulated in f32.
        p = jnp.exp((s - m_new).astype(jnp.bfloat16))             # (tq, tk) bf16
        l_sc[...] = alpha * l_sc[...] + jnp.sum(
            p.astype(jnp.float32), axis=-1, keepdims=True)
        pg = jnp.dot(p, g, preferred_element_type=jnp.float32)
    else:
        # v5e (no bf16 EUP): keep exp/elementwise math in f32.
        p = jnp.exp(s - m_new)                                    # (tq, tk) f32
        l_sc[...] = alpha * l_sc[...] + jnp.sum(p, axis=-1, keepdims=True)
        pg = jnp.dot(p.astype(jnp.bfloat16), g,
                     preferred_element_type=jnp.float32)

    acc_sc[...] = alpha * acc_sc[...] + pg
    m_sc[...] = m_new

    @pl.when(ki == pl.num_programs(2) - 1)
    def _():
        # Normalize (EUP approximate reciprocal), project with W, add bias and
        # residual.  Output tile is lane-dense (tq, Cop) fp32.
        inv_l = pl.reciprocal(l_sc[...], approx=True)             # (tq, 1)
        y = (acc_sc[...] * inv_l).astype(jnp.bfloat16)            # (tq, Cp)
        z = jnp.dot(y, ww_ref[...], preferred_element_type=jnp.float32)
        out_ref[0] = z + bw_ref[...] + x_ref[0]


# ----------------------------------------------------------------------------
# JAX glue: convs (g / shared) outside the kernel, channel padding, layout.
# ----------------------------------------------------------------------------
def _conv3d(inp, w, b, pad):
    out = jax.lax.conv_general_dilated(
        inp, w, window_strides=(1, 1, 1), padding=[(pad, pad)] * 3,
        dimension_numbers=("NCDHW", "OIDHW", "NCDHW"))
    return out + b.reshape(1, -1, 1, 1, 1)


def _round_up(v, m):
    return (v + m - 1) // m * m


def _tpu_generation():
    """Best-effort TPU generation detection (0 = unknown -> conservative)."""
    try:
        kind = jax.devices()[0].device_kind.lower()
    except Exception:
        return 0
    if "v7" in kind or "7x" in kind:
        return 7
    if "v6" in kind:
        return 6
    if "v5" in kind:
        return 5
    if "v4" in kind:
        return 4
    return 0


def _pick_tile(n, want, mult):
    """Largest t <= want that divides n and is a multiple of `mult`
    (TPU block-shape constraint), falling back to the full extent n."""
    want = min(want, n)
    if n % want == 0 and (want % mult == 0 or want == n):
        return want
    t = (want // mult) * mult
    while t >= mult:
        if n % t == 0:
            return t
        t -= mult
    return n


@functools.partial(jax.jit, static_argnames=("tq", "tk"))
def nonlocal_forward_pallas(x, x_t, params, *, tq=None, tk=None):
    wg_oi, bg, ws_oi, bs, ww_oi, bw = params
    B, C, T, H, W = x.shape
    Ci = wg_oi.shape[0]
    N = T * H * W

    # Per-generation tile / VMEM sizing (review: tiles were ~1.5 MiB of the
    # budget; raise tq first -- nq = N/tq controls phi/g re-read traffic).
    gen = _tpu_generation()
    if gen in (4, 5, 6):                       # 128 MiB VMEM parts
        vmem_limit = 100 * 1024 * 1024
        tq_def, tk_def = 2048, 2048
    else:                                      # v7x (64 MiB VMEM) or unknown
        vmem_limit = 48 * 1024 * 1024
        tq_def, tk_def = 2048, 1024
    exp_bf16 = gen in (6, 7)                   # bf16 EUP exp (not on v5e)

    tq = tq_def if tq is None else tq
    tk = tk_def if tk is None else tk

    Cp = _round_up(Ci, 128)     # padded inter_channels (matmul / lane width)
    Cop = _round_up(C, 128)     # padded in_channels (lane-dense output)

    # Fit the requested tiles to the VMEM budget.  Dominant consumers at large
    # tiles: the (tq, tk) f32 s/p temporaries plus double-buffered tiles.
    def _vmem_bytes(a, b):
        dbl = 2 * (a * Cp * 2          # theta tile (bf16)
                   + 2 * b * Cp * 2    # phi + g tiles (bf16)
                   + 2 * a * Cop * 4   # residual in + output out (f32)
                   + Cp * Cop * 2)     # W weight (bf16)
        scratch = a * Cp * 4 + 2 * a * 4
        temps = 2 * a * b * 4          # s and p (f32, compiler temporaries)
        return dbl + scratch + temps

    tq, tk = min(tq, N), min(tk, N)
    budget = int(0.75 * vmem_limit)
    while _vmem_bytes(tq, tk) > budget and tk > 128:
        tk //= 2
    while _vmem_bytes(tq, tk) > budget and tq > 128:
        tq //= 2
    # Snap to divisors of N.  tq sits in the sublane dim (mult of 8); tk is the
    # lane dim of the (Cp, tk) phi tile (mult of 128), or the full extent N.
    tq = _pick_tile(N, tq, 8)
    tk = _pick_tile(N, tk, 128)
    # No k-axis masking in the kernel: correctness requires exact divisibility.
    assert N % tq == 0 and N % tk == 0

    # Projections outside the kernel (cheap, O(N*C*Ci)); attention is in-kernel.
    g_xt = _conv3d(x_t, wg_oi, bg, 0)       # (B, Ci, T, H, W)
    theta = _conv3d(x, ws_oi, bs, 1)        # (B, Ci, T, H, W)
    phi = _conv3d(x_t, ws_oi, bs, 1)        # (B, Ci, T, H, W)

    def to_nc(a, cpad, dtype):              # (B, Cin, ...) -> (B, N, cpad)
        cin = a.shape[1]
        a = a.reshape(B, cin, N).transpose(0, 2, 1)
        if cpad > cin:
            a = jnp.pad(a, ((0, 0), (0, 0), (0, cpad - cin)))
        return a.astype(dtype)

    def to_cn(a, cpad, dtype):              # (B, Cin, ...) -> (B, cpad, N)
        cin = a.shape[1]
        a = a.reshape(B, cin, N)            # natural layout, no HBM transpose
        if cpad > cin:
            a = jnp.pad(a, ((0, 0), (0, cpad - cin), (0, 0)))
        return a.astype(dtype)

    theta_p = to_nc(theta, Cp, jnp.bfloat16)                  # (B, N, Cp)
    phi_p = to_cn(phi, Cp, jnp.bfloat16)                      # (B, Cp, N)
    g_p = to_nc(g_xt, Cp, jnp.bfloat16)                       # (B, N, Cp)
    x_p = to_nc(x, Cop, jnp.float32)                          # residual, fp32

    # W as a (Ci, C) matmul, zero-padded to (Cp, Cop); bias padded to (1, Cop).
    ww_mat = ww_oi.reshape(C, Ci).T
    ww_p = jnp.pad(ww_mat, ((0, Cp - Ci), (0, Cop - C))).astype(jnp.bfloat16)
    bw_p = jnp.pad(bw, (0, Cop - C)).reshape(1, Cop).astype(jnp.float32)

    nq, nk = N // tq, N // tk

    flops = 4 * B * N * N * Cp + 2 * B * N * Cp * Cop
    transc = B * N * N + 2 * B * N
    # theta is read once; phi and g are re-streamed nq times (their block index
    # changes every ki step); residual in + output out once each; W/bias once.
    bytes_acc = (2 * B * N * Cp * (1 + 2 * nq)
                 + 4 * 2 * B * N * Cop
                 + 2 * Cp * Cop + 4 * Cop)

    out = pl.pallas_call(
        functools.partial(_nl_flash_kernel, exp_bf16=exp_bf16),
        out_shape=jax.ShapeDtypeStruct((B, N, Cop), jnp.float32),
        grid_spec=pltpu.PrefetchScalarGridSpec(
            num_scalar_prefetch=0,
            grid=(B, nq, nk),
            in_specs=[
                pl.BlockSpec((1, tq, Cp), lambda b, qi, ki: (b, qi, 0)),   # theta
                pl.BlockSpec((1, Cp, tk), lambda b, qi, ki: (b, 0, ki)),   # phi
                pl.BlockSpec((1, tk, Cp), lambda b, qi, ki: (b, ki, 0)),   # g
                pl.BlockSpec((1, tq, Cop), lambda b, qi, ki: (b, qi, 0)),  # x
                pl.BlockSpec((Cp, Cop), lambda b, qi, ki: (0, 0)),         # W
                pl.BlockSpec((1, Cop), lambda b, qi, ki: (0, 0)),          # bias
            ],
            out_specs=pl.BlockSpec((1, tq, Cop), lambda b, qi, ki: (b, qi, 0)),
            scratch_shapes=[
                pltpu.VMEM((tq, 1), jnp.float32),    # running max
                pltpu.VMEM((tq, 1), jnp.float32),    # running sum
                pltpu.VMEM((tq, Cp), jnp.float32),   # output accumulator
            ],
        ),
        compiler_params=pltpu.CompilerParams(
            # ki is the reduction axis and MUST stay innermost + "arbitrary";
            # on v7x the two parallel axes (B, nq) are sharded across the 2 TCs
            # (keep B*nq >= 2 and even when enlarging tq).
            dimension_semantics=("parallel", "parallel", "arbitrary"),
            vmem_limit_bytes=vmem_limit),
        cost_estimate=pl.CostEstimate(
            flops=flops, transcendentals=transc, bytes_accessed=bytes_acc),
        # Aliasing the padded residual (input 3) with the output is safe ONLY
        # because the output index_map does not depend on ki and ki is the
        # innermost "arbitrary" axis: the (b, qi) residual block is fetched
        # before that block's writeback at ki == nk-1.  Do not reorder the grid.
        input_output_aliases={3: 0},
    )(theta_p, phi_p, g_p, x_p, ww_p, bw_p)

    # (B, N, Cop) -> drop channel padding -> NCDHW
    z = out[:, :, :C]
    return z.reshape(B, T, H, W, C).transpose(0, 4, 1, 2, 3)


# ----------------------------------------------------------------------------
# Pure-JAX fp32 reference (mirrors the PyTorch module) for verification.
# ----------------------------------------------------------------------------
def nonlocal_forward_reference(x, x_t, params):
    wg_oi, bg, ws_oi, bs, ww_oi, bw = params
    B, C, T, H, W = x.shape
    Ci = wg_oi.shape[0]
    N = T * H * W

    g_xt = _conv3d(x_t, wg_oi, bg, 0).reshape(B, Ci, N).transpose(0, 2, 1)
    theta = _conv3d(x, ws_oi, bs, 1).reshape(B, Ci, N).transpose(0, 2, 1)
    phi = _conv3d(x_t, ws_oi, bs, 1).reshape(B, Ci, N)
    f = jnp.matmul(theta, phi)
    f_div_c = jax.nn.softmax(f, axis=-1)
    y = jnp.matmul(f_div_c, g_xt)                         # (B, N, Ci)
    y = y.transpose(0, 2, 1).reshape(B, Ci, T, H, W)
    w_y = _conv3d(y, ww_oi, bw, 0)
    return w_y + x


# ----------------------------------------------------------------------------
# Deterministic parameter construction (shapes per _NonLocalBlockND.__init__).
# ----------------------------------------------------------------------------
def make_params(key, in_channels, inter_channels):
    ks = jax.random.split(key, 6)
    C, Ci = in_channels, inter_channels
    wg_oi = 0.1 * jax.random.normal(ks[0], (Ci, C, 1, 1, 1), jnp.float32)
    bg = 0.1 * jax.random.normal(ks[1], (Ci,), jnp.float32)
    ws_oi = 0.1 * jax.random.normal(ks[2], (Ci, C, 3, 3, 3), jnp.float32)
    bs = 0.1 * jax.random.normal(ks[3], (Ci,), jnp.float32)
    # NOTE: the original module zero-inits W (weight and bias), which would make
    # z == x trivially; small random values exercise the attention path.
    ww_oi = 0.1 * jax.random.normal(ks[4], (C, Ci, 1, 1, 1), jnp.float32)
    bw = 0.1 * jax.random.normal(ks[5], (C,), jnp.float32)
    return (wg_oi, bg, ws_oi, bs, ww_oi, bw)


if __name__ == "__main__":
    # Small NCDHW shapes; N = T*H*W = 256 so tq=tk=128 exercises the online
    # softmax accumulation across multiple k-tiles and multiple q-tiles.
    B, C, T, H, W = 2, 8, 2, 16, 8
    Ci = C // 2

    key = jax.random.PRNGKey(0)
    kx, kxt, kp = jax.random.split(key, 3)
    x = jax.random.normal(kx, (B, C, T, H, W), jnp.float32)
    x_t = jax.random.normal(kxt, (B, C, T, H, W), jnp.float32)
    params = make_params(kp, C, Ci)

    z = nonlocal_forward_pallas(x, x_t, params, tq=128, tk=128)
    z = jax.block_until_ready(z)

    z_ref = jax.block_until_ready(nonlocal_forward_reference(x, x_t, params))

    # bf16 MXU operands (+ bf16 exp on v6e/v7x) + approximate reciprocal ->
    # compare with bf16-level tolerance against the fp32 reference.
    np.testing.assert_allclose(np.asarray(z), np.asarray(z_ref),
                               rtol=5e-2, atol=5e-2)
    print("KERNEL_OK")
</pallas_src>

<mosaic_0001>
module attributes {stable_mosaic.version = 11 : i64} {
  func.func @_nl_flash_kernel(%arg0: i32, %arg1: i32, %arg2: i32, %arg3: memref<1x128x128xbf16, #tpu.memory_space<vmem>>, %arg4: memref<1x128x128xbf16, #tpu.memory_space<vmem>>, %arg5: memref<1x128x128xbf16, #tpu.memory_space<vmem>>, %arg6: memref<1x128x128xf32, #tpu.memory_space<vmem>>, %arg7: memref<128x128xbf16, #tpu.memory_space<vmem>>, %arg8: memref<1x128xf32, #tpu.memory_space<vmem>>, %arg9: memref<1x128x128xf32, #tpu.memory_space<vmem>>, %arg10: memref<128x1xf32, #tpu.memory_space<vmem>>, %arg11: memref<128x1xf32, #tpu.memory_space<vmem>>, %arg12: memref<128x128xf32, #tpu.memory_space<vmem>>) attributes {dimension_semantics = [#tpu.dimension_semantics<parallel>, #tpu.dimension_semantics<parallel>, #tpu.dimension_semantics<arbitrary>], iteration_bounds = array<i64: 2, 2, 2>, scalar_prefetch = 0 : i64, scratch_operands = 3 : i64, tpu.core_type = #tpu.core_type<tc>, window_params = [{transform_indices = @transform_0, window_bounds = array<i64: 1, 128, 128>}, {transform_indices = @transform_1, window_bounds = array<i64: 1, 128, 128>}, {transform_indices = @transform_2, window_bounds = array<i64: 1, 128, 128>}, {transform_indices = @transform_3, window_bounds = array<i64: 1, 128, 128>}, {pipeline_mode = #tpu.pipeline_mode<synchronous>, transform_indices = @transform_4, window_bounds = array<i64: 128, 128>}, {pipeline_mode = #tpu.pipeline_mode<synchronous>, transform_indices = @transform_5, window_bounds = array<i64: 1, 128>}, {transform_indices = @transform_6, window_bounds = array<i64: 1, 128, 128>}]} {
    %c0_i32 = arith.constant 0 : i32
    %0 = arith.cmpi eq, %arg2, %c0_i32 : i32
    %1 = arith.extui %0 : i1 to i32
    %c0_i32_0 = arith.constant 0 : i32
    %2 = arith.cmpi ne, %1, %c0_i32_0 : i32
    scf.if %2 {
      %cst_25 = arith.constant 0xFF800000 : f32
      %36 = vector.broadcast %cst_25 : f32 to vector<128x1xf32>
      %c0_26 = arith.constant 0 : index
      %c0_27 = arith.constant 0 : index
      %37 = vector.load %arg10[%c0_26, %c0_27] : memref<128x1xf32, #tpu.memory_space<vmem>>, vector<128x1xf32>
      tpu.vector_store %arg10[%c0_26, %c0_27], %36 {strides = array<i32>} : memref<128x1xf32, #tpu.memory_space<vmem>>, vector<128x1xf32>,
      %cst_28 = arith.constant 0.000000e+00 : f32
      %38 = vector.broadcast %cst_28 : f32 to vector<128x1xf32>
      %c0_29 = arith.constant 0 : index
      %c0_30 = arith.constant 0 : index
      %39 = vector.load %arg11[%c0_29, %c0_30] : memref<128x1xf32, #tpu.memory_space<vmem>>, vector<128x1xf32>
      tpu.vector_store %arg11[%c0_29, %c0_30], %38 {strides = array<i32>} : memref<128x1xf32, #tpu.memory_space<vmem>>, vector<128x1xf32>,
      %cst_31 = arith.constant 0.000000e+00 : f32
      %40 = vector.broadcast %cst_31 : f32 to vector<128x128xf32>
      %c0_32 = arith.constant 0 : index
      %c0_33 = arith.constant 0 : index
      %41 = vector.load %arg12[%c0_32, %c0_33] : memref<128x128xf32, #tpu.memory_space<vmem>>, vector<128x128xf32>
      tpu.vector_store %arg12[%c0_32, %c0_33], %40 {strides = array<i32>} : memref<128x128xf32, #tpu.memory_space<vmem>>, vector<128x128xf32>,
    } else {
    }
    %c0 = arith.constant 0 : index
    %c0_1 = arith.constant 0 : index
    %c0_2 = arith.constant 0 : index
    %3 = vector.load %arg3[%c0, %c0_1, %c0_2] : memref<1x128x128xbf16, #tpu.memory_space<vmem>>, vector<1x128x128xbf16>
    %4 = vector.shape_cast %3 : vector<1x128x128xbf16> to vector<128x128xbf16>
    %c0_3 = arith.constant 0 : index
    %c0_4 = arith.constant 0 : index
    %c0_5 = arith.constant 0 : index
    %5 = vector.load %arg4[%c0_3, %c0_4, %c0_5] : memref<1x128x128xbf16, #tpu.memory_space<vmem>>, vector<1x128x128xbf16>
    %6 = vector.shape_cast %5 : vector<1x128x128xbf16> to vector<128x128xbf16>
    %c0_6 = arith.constant 0 : index
    %c0_7 = arith.constant 0 : index
    %c0_8 = arith.constant 0 : index
    %7 = vector.load %arg5[%c0_6, %c0_7, %c0_8] : memref<1x128x128xbf16, #tpu.memory_space<vmem>>, vector<1x128x128xbf16>
    %8 = vector.shape_cast %7 : vector<1x128x128xbf16> to vector<128x128xbf16>
    %cst = arith.constant dense<0.000000e+00> : vector<128x128xf32>
    %9 = tpu.matmul %4, %6, %cst {dimension_numbers = #tpu.dot_dimension_numbers<[1], [0], [0], [1], [0, 0, 1, 1], [], []>} : vector<128x128xbf16>, vector<128x128xbf16>, vector<128x128xf32> -> vector<128x128xf32>
    %c0_9 = arith.constant 0 : index
    %c0_10 = arith.constant 0 : index
    %10 = vector.load %arg10[%c0_9, %c0_10] : memref<128x1xf32, #tpu.memory_space<vmem>>, vector<128x1xf32>
    %cst_11 = arith.constant dense<0xFF800000> : vector<128xf32>
    %11 = vector.multi_reduction <maximumf>, %9, %cst_11 [1] : vector<128x128xf32> to vector<128xf32>
    %12 = vector.shape_cast %11 : vector<128xf32> to vector<128x1xf32>
    %13 = arith.maximumf %10, %12 : vector<128x1xf32>
    %14 = arith.subf %10, %13 : vector<128x1xf32>
    %15 = math.exp %14 : vector<128x1xf32>
    %16 = vector.broadcast %13 : vector<128x1xf32> to vector<128x128xf32>
    %17 = arith.subf %9, %16 : vector<128x128xf32>
    %18 = math.exp %17 : vector<128x128xf32>
    %c0_12 = arith.constant 0 : index
    %c0_13 = arith.constant 0 : index
    %19 = vector.load %arg11[%c0_12, %c0_13] : memref<128x1xf32, #tpu.memory_space<vmem>>, vector<128x1xf32>
    %20 = arith.mulf %15, %19 : vector<128x1xf32>
    %cst_14 = arith.constant dense<0.000000e+00> : vector<128xf32>
    %21 = vector.multi_reduction <add>, %18, %cst_14 [1] : vector<128x128xf32> to vector<128xf32>
    %22 = vector.shape_cast %21 : vector<128xf32> to vector<128x1xf32>
    %23 = arith.addf %20, %22 : vector<128x1xf32>
    %c0_15 = arith.constant 0 : index
    %c0_16 = arith.constant 0 : index
    %24 = vector.load %arg11[%c0_15, %c0_16] : memref<128x1xf32, #tpu.memory_space<vmem>>, vector<128x1xf32>
    tpu.vector_store %arg11[%c0_15, %c0_16], %23 {strides = array<i32>} : memref<128x1xf32, #tpu.memory_space<vmem>>, vector<128x1xf32>,
    %25 = arith.truncf %18 : vector<128x128xf32> to vector<128x128xbf16>
    %cst_17 = arith.constant dense<0.000000e+00> : vector<128x128xf32>
    %26 = tpu.matmul %25, %8, %cst_17 {dimension_numbers = #tpu.dot_dimension_numbers<[1], [0], [0], [1], [0, 0, 1, 1], [], []>} : vector<128x128xbf16>, vector<128x128xbf16>, vector<128x128xf32> -> vector<128x128xf32>
    %c0_18 = arith.constant 0 : index
    %c0_19 = arith.constant 0 : index
    %27 = vector.load %arg12[%c0_18, %c0_19] : memref<128x128xf32, #tpu.memory_space<vmem>>, vector<128x128xf32>
    %28 = vector.broadcast %15 : vector<128x1xf32> to vector<128x128xf32>
    %29 = arith.mulf %28, %27 : vector<128x128xf32>
    %30 = arith.addf %29, %26 : vector<128x128xf32>
    %c0_20 = arith.constant 0 : index
    %c0_21 = arith.constant 0 : index
    %31 = vector.load %arg12[%c0_20, %c0_21] : memref<128x128xf32, #tpu.memory_space<vmem>>, vector<128x128xf32>
    tpu.vector_store %arg12[%c0_20, %c0_21], %30 {strides = array<i32>} : memref<128x128xf32, #tpu.memory_space<vmem>>, vector<128x128xf32>,
    %c0_22 = arith.constant 0 : index
    %c0_23 = arith.constant 0 : index
    %32 = vector.load %arg10[%c0_22, %c0_23] : memref<128x1xf32, #tpu.memory_space<vmem>>, vector<128x1xf32>
    tpu.vector_store %arg10[%c0_22, %c0_23], %13 {strides = array<i32>} : memref<128x1xf32, #tpu.memory_space<vmem>>, vector<128x1xf32>,
    %c1_i32 = arith.constant 1 : i32
    %33 = arith.cmpi eq, %arg2, %c1_i32 : i32
    %34 = arith.extui %33 : i1 to i32
    %c0_i32_24 = arith.constant 0 : i32
    %35 = arith.cmpi ne, %34, %c0_i32_24 : i32
    scf.if %35 {
      %c0_25 = arith.constant 0 : index
      %c0_26 = arith.constant 0 : index
      %36 = vector.load %arg11[%c0_25, %c0_26] : memref<128x1xf32, #tpu.memory_space<vmem>>, vector<128x1xf32>
      %37 = tpu.reciprocal %36 {approx = true} : vector<128x1xf32> -> vector<128x1xf32>
      %c0_27 = arith.constant 0 : index
      %c0_28 = arith.constant 0 : index
      %38 = vector.load %arg12[%c0_27, %c0_28] : memref<128x128xf32, #tpu.memory_space<vmem>>, vector<128x128xf32>
      %39 = vector.broadcast %37 : vector<128x1xf32> to vector<128x128xf32>
      %40 = arith.mulf %38, %39 : vector<128x128xf32>
      %41 = arith.truncf %40 : vector<128x128xf32> to vector<128x128xbf16>
      %c0_29 = arith.constant 0 : index
      %c0_30 = arith.constant 0 : index
      %42 = vector.load %arg7[%c0_29, %c0_30] : memref<128x128xbf16, #tpu.memory_space<vmem>>, vector<128x128xbf16>
      %cst_31 = arith.constant dense<0.000000e+00> : vector<128x128xf32>
      %43 = tpu.matmul %41, %42, %cst_31 {dimension_numbers = #tpu.dot_dimension_numbers<[1], [0], [0], [1], [0, 0, 1, 1], [], []>} : vector<128x128xbf16>, vector<128x128xbf16>, vector<128x128xf32> -> vector<128x128xf32>
      %c0_32 = arith.constant 0 : index
      %c0_33 = arith.constant 0 : index
      %44 = vector.load %arg8[%c0_32, %c0_33] : memref<1x128xf32, #tpu.memory_space<vmem>>, vector<1x128xf32>
      %45 = vector.broadcast %44 : vector<1x128xf32> to vector<128x128xf32>
      %46 = arith.addf %43, %45 : vector<128x128xf32>
      %c0_34 = arith.constant 0 : index
      %c0_35 = arith.constant 0 : index
      %c0_36 = arith.constant 0 : index
      %47 = vector.load %arg6[%c0_34, %c0_35, %c0_36] : memref<1x128x128xf32, #tpu.memory_space<vmem>>, vector<1x128x128xf32>
      %48 = vector.shape_cast %47 : vector<1x128x128xf32> to vector<128x128xf32>
      %49 = arith.addf %46, %48 : vector<128x128xf32>
      %c0_37 = arith.constant 0 : index
      %c0_38 = arith.constant 0 : index
      %c0_39 = arith.constant 0 : index
      %50 = vector.load %arg9[%c0_37, %c0_38, %c0_39] : memref<1x128x128xf32, #tpu.memory_space<vmem>>, vector<1x128x128xf32>
      %51 = vector.shape_cast %50 : vector<1x128x128xf32> to vector<128x128xf32>
      %52 = vector.shape_cast %49 : vector<128x128xf32> to vector<1x128x128xf32>
      tpu.vector_store %arg9[%c0_37, %c0_38, %c0_39], %52 {strides = array<i32>} : memref<1x128x128xf32, #tpu.memory_space<vmem>>, vector<1x128x128xf32>,
    } else {
    }
    return
  }
  func.func @transform_0(%arg0: i32, %arg1: i32, %arg2: i32) -> (i32, i32, i32) {
    %c0_i32 = arith.constant 0 : i32
    %c0_i32_0 = arith.constant 0 : i32
    return %arg0, %arg1, %c0_i32 : i32, i32, i32
  }
  func.func @transform_1(%arg0: i32, %arg1: i32, %arg2: i32) -> (i32, i32, i32) {
    %c0_i32 = arith.constant 0 : i32
    %c0_i32_0 = arith.constant 0 : i32
    return %arg0, %c0_i32, %arg2 : i32, i32, i32
  }
  func.func @transform_2(%arg0: i32, %arg1: i32, %arg2: i32) -> (i32, i32, i32) {
    %c0_i32 = arith.constant 0 : i32
    %c0_i32_0 = arith.constant 0 : i32
    return %arg0, %arg2, %c0_i32 : i32, i32, i32
  }
  func.func @transform_3(%arg0: i32, %arg1: i32, %arg2: i32) -> (i32, i32, i32) {
    %c0_i32 = arith.constant 0 : i32
    %c0_i32_0 = arith.constant 0 : i32
    return %arg0, %arg1, %c0_i32 : i32, i32, i32
  }
  func.func @transform_4(%arg0: i32, %arg1: i32, %arg2: i32) -> (i32, i32) {
    %c0_i32 = arith.constant 0 : i32
    %c0_i32_0 = arith.constant 0 : i32
    %c0_i32_1 = arith.constant 0 : i32
    return %c0_i32, %c0_i32_0 : i32, i32
  }
  func.func @transform_5(%arg0: i32, %arg1: i32, %arg2: i32) -> (i32, i32) {
    %c0_i32 = arith.constant 0 : i32
    %c0_i32_0 = arith.constant 0 : i32
    %c0_i32_1 = arith.constant 0 : i32
    return %c0_i32, %c0_i32_0 : i32, i32
  }
  func.func @transform_6(%arg0: i32, %arg1: i32, %arg2: i32) -> (i32, i32, i32) {
    %c0_i32 = arith.constant 0 : i32
    %c0_i32_0 = arith.constant 0 : i32
    return %arg0, %arg1, %c0_i32 : i32, i32, i32
  }
}

</mosaic_0001>

<llo_original>
// kernel: nonlocal_forward_pallas.1
$region0: #{nonlocal_forward_pallas.1}
  #allocation0 [shape = 'u32[]', space=smem, size = 0x4, offset = 0x4, fixed_abs, tag = 'smem constant byte address 0x4 - core index']
  #allocation1 [shape = 'u32[72,128]{1,0:T(1,128)}', space=vmem, size = 0x9000, scoped, tag = 'internal scratch']
  #allocation2 [shape = 'f32[128,1]{1,0:T(8,128)}', space=vmem, size = 0x10000, scoped, tag = 'scratch operand']
  #allocation3 [shape = 'f32[128,1]{1,0:T(8,128)}', space=vmem, size = 0x10000, scoped, tag = 'scratch operand']
  #allocation4 [shape = 'f32[128,128]{1,0:T(8,128)}', space=vmem, size = 0x10000, scoped, tag = 'scratch operand']
  %s0 = inlined_call_operand.vmem [shape: bf16[2,256,128], index: 0, kind: input, shape index: {}]
  %s1 = inlined_call_operand.vmem [shape: bf16[2,128,256], index: 1, kind: input, shape index: {}]
  %s2 = inlined_call_operand.vmem [shape: bf16[2,256,128], index: 2, kind: input, shape index: {}]
  %s3 = inlined_call_operand.vmem [shape: f32[2,256,128], index: 3, kind: input, shape index: {}, may-alias: {3,6}]
  %s4 = inlined_call_operand.vmem [shape: bf16[128,128], index: 4, kind: input, shape index: {}]
  %s5 = inlined_call_operand.vmem [shape: f32[1,128], index: 5, kind: input, shape index: {}]
  %s6 = inlined_call_operand.vmem [shape: f32[2,256,128], index: 6, kind: output, shape index: {}, may-alias: {3,6}]
  %s7 = sld [smem:[#allocation0]]
  $region106: #{nonlocal_forward_pallas.1} parent=0
    _
  %s9 = ssub.s32 1, %s7
  %s10 = scalar_select 0, %s9, %s7
  $region1: #{nonlocal_forward_pallas.1} parent=0
    #allocation5 [shape = 'u8[65536]{0}', space=vmem, size = 0x10000, scoped, tag = 'input window, operand 1']
    loop: start=0, step=1, limit=10
    $region2: #{nonlocal_forward_pallas.1} parent=1 // loop_pre_header
      _
    $region3: #{nonlocal_forward_pallas.1} parent=1 // loop_header
      %s12 = sphi 0, %s16
      %p13 = scmp.ge.s32.totalorder %s12, 10
      %s19 = sphi 0, %s38
      %s20 = sphi 0, %s34
      %s21 = sphi 0, %s30
      %s22 = sphi 0, %s19
      %s23 = sphi 0, %s20
      %s24 = sphi 0, %s21
      %s25 = sphi 0, %s22
      %s26 = sphi 0, %s23
      %s27 = sphi 0, %s24
      %s43 = sphi 0, %s45
      %s46 = sphi 0, %s43
      %s47 = sphi 0, %s46
      %s63 = sphi 0, %s47
      %s71 = sphi 0, %s73
      %s74 = sphi 0, %s71
      %s75 = sphi 0, %s74
      %s91 = sphi 0, %s75
      %s99 = sphi 0, %s101
      %s102 = sphi 0, %s99
      %s103 = sphi 0, %s102
      %s119 = sphi 0, %s103
      %s127 = sphi 0, %s129
      %s130 = sphi 0, %s127
      %s131 = sphi 0, %s130
      %s147 = sphi 0, %s131
      %s151 = sphi 0, %s151
      %s153 = sphi 0, %s151
      %s154 = sphi 0, %s153
      %s168 = sphi 0, %s154
      %s172 = sphi 0, %s172
      %s174 = sphi 0, %s172
      %s175 = sphi 0, %s174
      %s189 = sphi 0, %s175
      %s197 = sphi 0, %s199
      %s200 = sphi 0, %s197
      %s201 = sphi 0, %s200
      %s217 = sphi 0, %s201
    $region4: #{nonlocal_forward_pallas.1} parent=1 // loop_header_branch
      %15 = sbr.rel (%p13) target = $region8
    $region5: #{nonlocal_forward_pallas.1} parent=1 // loop_body
      %s17 = ssub.s32 %s12, 1
      %s18 = ssub.s32 %s12, 2
      %s28 = sadd.s32 1, %s21
      %p29 = scmp.ge.s32.totalorder %s28, 2
      %s30 = scalar_select %p29, 0, %s28
      %s31 = sadd.s32 1, %s20
      %s32 = scalar_select %p29, %s31, %s20
      %p33 = scmp.ge.s32.totalorder %s32, 2
      %s34 = scalar_select %p33, 0, %s32
      %s35 = sadd.s32 1, %s19
      %s36 = scalar_select %p33, %s35, %s19
      %p37 = scmp.ge.s32.totalorder %s36, 2
      %s38 = scalar_select %p37, 0, %s36
      %s39 = ssub.s32 %s19, %s38
      %s40 = ssub.s32 %s20, %s34
      %s41 = sor.u32 %s39, %s40
      %p42 = scmp.eq.s32.totalorder %s41, 0
      %s44 = sadd.s32 %s43, 1
      %s45 = scalar_select %p42, %s43, %s44
      %p48 = pneg %p42
      %p49 = scmp.eq.s32.totalorder %s12, 7
      %p50 = por %p48, %p49
      %p51 = scmp.ne.s32.totalorder %s43, %s46
      %p52 = scmp.eq.s32.totalorder %s12, 0
      %p53 = por %p51, %p52
      %p54 = scmp.ne.s32.totalorder %s43, %s46
      %p55 = scmp.eq.s32.totalorder %s17, 7
      %p56 = por %p54, %p55
      %p57 = scmp.ne.s32.totalorder %s46, %s47
      %p58 = scmp.eq.s32.totalorder %s17, 0
      %p59 = por %p57, %p58
      %p60 = scmp.ne.s32.totalorder %s46, %s47
      %p61 = scmp.eq.s32.totalorder %s18, 7
      %p62 = por %p60, %p61
      %p64 = scmp.ne.s32.totalorder %s47, %s63
      %p65 = scmp.eq.s32.totalorder %s18, 0
      %p66 = por %p64, %p65
      %s67 = ssub.s32 %s19, %s38
      %s68 = ssub.s32 %s21, %s30
      %s69 = sor.u32 %s67, %s68
      %p70 = scmp.eq.s32.totalorder %s69, 0
      %s72 = sadd.s32 %s71, 1
      %s73 = scalar_select %p70, %s71, %s72
      %p76 = pneg %p70
      %p77 = scmp.eq.s32.totalorder %s12, 7
      %p78 = por %p76, %p77
      %p79 = scmp.ne.s32.totalorder %s71, %s74
      %p80 = scmp.eq.s32.totalorder %s12, 0
      %p81 = por %p79, %p80
      %p82 = scmp.ne.s32.totalorder %s71, %s74
      %p83 = scmp.eq.s32.totalorder %s17, 7
      %p84 = por %p82, %p83
      %p85 = scmp.ne.s32.totalorder %s74, %s75
      %p86 = scmp.eq.s32.totalorder %s17, 0
      %p87 = por %p85, %p86
      %p88 = scmp.ne.s32.totalorder %s74, %s75
      %p89 = scmp.eq.s32.totalorder %s18, 7
      %p90 = por %p88, %p89
      %p92 = scmp.ne.s32.totalorder %s75, %s91
      %p93 = scmp.eq.s32.totalorder %s18, 0
      %p94 = por %p92, %p93
      %s95 = ssub.s32 %s19, %s38
      %s96 = ssub.s32 %s21, %s30
      %s97 = sor.u32 %s95, %s96
      %p98 = scmp.eq.s32.totalorder %s97, 0
      %s100 = sadd.s32 %s99, 1
      %s101 = scalar_select %p98, %s99, %s100
      %p104 = pneg %p98
      %p105 = scmp.eq.s32.totalorder %s12, 7
      %p106 = por %p104, %p105
      %p107 = scmp.ne.s32.totalorder %s99, %s102
      %p108 = scmp.eq.s32.totalorder %s12, 0
      %p109 = por %p107, %p108
      %p110 = scmp.ne.s32.totalorder %s99, %s102
      %p111 = scmp.eq.s32.totalorder %s17, 7
      %p112 = por %p110, %p111
      %p113 = scmp.ne.s32.totalorder %s102, %s103
      %p114 = scmp.eq.s32.totalorder %s17, 0
      %p115 = por %p113, %p114
      %p116 = scmp.ne.s32.totalorder %s102, %s103
      %p117 = scmp.eq.s32.totalorder %s18, 7
      %p118 = por %p116, %p117
      %p120 = scmp.ne.s32.totalorder %s103, %s119
      %p121 = scmp.eq.s32.totalorder %s18, 0
      %p122 = por %p120, %p121
      %s123 = ssub.s32 %s19, %s38
      %s124 = ssub.s32 %s20, %s34
      %s125 = sor.u32 %s123, %s124
      %p126 = scmp.eq.s32.totalorder %s125, 0
      %s128 = sadd.s32 %s127, 1
      %s129 = scalar_select %p126, %s127, %s128
      %p132 = pneg %p126
      %p133 = scmp.eq.s32.totalorder %s12, 7
      %p134 = por %p132, %p133
      %p135 = scmp.ne.s32.totalorder %s127, %s130
      %p136 = scmp.eq.s32.totalorder %s12, 0
      %p137 = por %p135, %p136
      %p138 = scmp.ne.s32.totalorder %s127, %s130
      %p139 = scmp.eq.s32.totalorder %s17, 7
      %p140 = por %p138, %p139
      %p141 = scmp.ne.s32.totalorder %s130, %s131
      %p142 = scmp.eq.s32.totalorder %s17, 0
      %p143 = por %p141, %p142
      %p144 = scmp.ne.s32.totalorder %s130, %s131
      %p145 = scmp.eq.s32.totalorder %s18, 7
      %p146 = por %p144, %p145
      %p148 = scmp.ne.s32.totalorder %s131, %s147
      %p149 = scmp.eq.s32.totalorder %s18, 0
      %p150 = por %p148, %p149
      %s152 = sadd.s32 %s151, 1
      %p155 = scmp.eq.s32.totalorder %s12, 7
      %p156 = scmp.ne.s32.totalorder %s151, %s153
      %p157 = scmp.eq.s32.totalorder %s12, 0
      %p158 = por %p156, %p157
      %p159 = scmp.ne.s32.totalorder %s151, %s153
      %p160 = scmp.eq.s32.totalorder %s17, 7
      %p161 = por %p159, %p160
      %p162 = scmp.ne.s32.totalorder %s153, %s154
      %p163 = scmp.eq.s32.totalorder %s17, 0
      %p164 = por %p162, %p163
      %p165 = scmp.ne.s32.totalorder %s153, %s154
      %p166 = scmp.eq.s32.totalorder %s18, 7
      %p167 = por %p165, %p166
      %p169 = scmp.ne.s32.totalorder %s154, %s168
      %p170 = scmp.eq.s32.totalorder %s18, 0
      %p171 = por %p169, %p170
      %s173 = sadd.s32 %s172, 1
      %p176 = scmp.eq.s32.totalorder %s12, 7
      %p177 = scmp.ne.s32.totalorder %s172, %s174
      %p178 = scmp.eq.s32.totalorder %s12, 0
      %p179 = por %p177, %p178
      %p180 = scmp.ne.s32.totalorder %s172, %s174
      %p181 = scmp.eq.s32.totalorder %s17, 7
      %p182 = por %p180, %p181
      %p183 = scmp.ne.s32.totalorder %s174, %s175
      %p184 = scmp.eq.s32.totalorder %s17, 0
      %p185 = por %p183, %p184
      %p186 = scmp.ne.s32.totalorder %s174, %s175
      %p187 = scmp.eq.s32.totalorder %s18, 7
      %p188 = por %p186, %p187
      %p190 = scmp.ne.s32.totalorder %s175, %s189
      %p191 = scmp.eq.s32.totalorder %s18, 0
      %p192 = por %p190, %p191
      %s193 = ssub.s32 %s19, %s38
      %s194 = ssub.s32 %s20, %s34
      %s195 = sor.u32 %s193, %s194
      %p196 = scmp.eq.s32.totalorder %s195, 0
      %s198 = sadd.s32 %s197, 1
      %s199 = scalar_select %p196, %s197, %s198
      %p202 = pneg %p196
      %p203 = scmp.eq.s32.totalorder %s12, 7
      %p204 = por %p202, %p203
      %p205 = scmp.ne.s32.totalorder %s197, %s200
      %p206 = scmp.eq.s32.totalorder %s12, 0
      %p207 = por %p205, %p206
      %p208 = scmp.ne.s32.totalorder %s197, %s200
      %p209 = scmp.eq.s32.totalorder %s17, 7
      %p210 = por %p208, %p209
      %p211 = scmp.ne.s32.totalorder %s200, %s201
      %p212 = scmp.eq.s32.totalorder %s17, 0
      %p213 = por %p211, %p212
      %p214 = scmp.ne.s32.totalorder %s200, %s201
      %p215 = scmp.eq.s32.totalorder %s18, 7
      %p216 = por %p214, %p215
      %p218 = scmp.ne.s32.totalorder %s201, %s217
      %p219 = scmp.eq.s32.totalorder %s18, 0
      %p220 = por %p218, %p219
      %p221 = scmp.le.s32.totalorder 1, %s12
      %p222 = scmp.lt.s32.totalorder %s12, 9
      %p223 = pnand %p221, %p222
      %p224 = pneg %p223
      // Predicated region
      $region9: #{nonlocal_forward_pallas.1} parent=5 // pred_check
        _
      $region10: #{nonlocal_forward_pallas.1} parent=5 // pred_check_branch
        %226 = sbr.rel (%p223) target = $region12
      $region11: #{nonlocal_forward_pallas.1} parent=5 // pred_region
        %s227 = ssub.s32 %s12, 1
        // Predicated region
        $region13: #{nonlocal_forward_pallas.1} parent=11 // pred_check
          %p228 = pneg %p164
        $region14: #{nonlocal_forward_pallas.1} parent=11 // pred_check_branch
          %230 = sbr.rel (%p228) target = $region16
        $region15: #{nonlocal_forward_pallas.1} parent=11 // pred_region
          _
        $region16: #{nonlocal_forward_pallas.1} parent=11 // pred_fallthru
          _
        // Predicated region
        $region17: #{nonlocal_forward_pallas.1} parent=11 // pred_check
          %p231 = pneg %p185
        $region18: #{nonlocal_forward_pallas.1} parent=11 // pred_check_branch
          %233 = sbr.rel (%p231) target = $region20
        $region19: #{nonlocal_forward_pallas.1} parent=11 // pred_region
          _
        $region20: #{nonlocal_forward_pallas.1} parent=11 // pred_fallthru
          _
      $region12: #{nonlocal_forward_pallas.1} parent=5 // pred_fallthru
        _
      %p234 = scmp.lt.s32.totalorder %s12, 8
      // Predicated region
      $region21: #{nonlocal_forward_pallas.1} parent=5 // pred_check
        %p235 = pneg %p234
      $region22: #{nonlocal_forward_pallas.1} parent=5 // pred_check_branch
        %237 = sbr.rel (%p235) target = $region24
      $region23: #{nonlocal_forward_pallas.1} parent=5 // pred_region
        // Predicated region
        $region25: #{nonlocal_forward_pallas.1} parent=23 // pred_check
          %p238 = pneg %p53
        $region26: #{nonlocal_forward_pallas.1} parent=23 // pred_check_branch
          %240 = sbr.rel (%p238) target = $region28
        $region27: #{nonlocal_forward_pallas.1} parent=23 // pred_region
          %s241 = smul.u32 16, %s20
          %p242 = scmp.lt.s32.totalorder %s19, 1
          %s243 = scalar_select %p242, %s19, 1
          %p244 = scmp.lt.s32.totalorder %s241, 31
          %s245 = scalar_select %p244, %s241, 31
          %s246 = smul.addr %s243, 32
          %s247 = sadd.s32 %s245, %s246
          %s248 = smul.addr %s247, 4
          %s249 = scalar_lea.vmem %s0, %s248
          %s250 = smul.u32 16, %s20
        $region28: #{nonlocal_forward_pallas.1} parent=23 // pred_fallthru
          _
        // Predicated region
        $region29: #{nonlocal_forward_pallas.1} parent=23 // pred_check
          %p251 = pneg %p81
        $region30: #{nonlocal_forward_pallas.1} parent=23 // pred_check_branch
          %253 = sbr.rel (%p251) target = $region32
        $region31: #{nonlocal_forward_pallas.1} parent=23 // pred_region
          %s254 = sand.u32 %s71, 1
          %s255 = sand.u32 %s71, 1
          %s256 = smul.addr %s255, 64
          %s257 = scalar_lea.vmem [#allocation5], %s256
          %s258 = smul.addr %s19, 32
          %s259 = sadd.s32 %s21, %s258
          %s260 = smul.addr %s259, 4
          %s261 = scalar_lea.vmem %s1, %s260
          // Predicated region
          $region33: #{nonlocal_forward_pallas.1} parent=31 // pred_check
            _
          $region34: #{nonlocal_forward_pallas.1} parent=31 // pred_check_branch
            %263 = sbr.rel (0) target = $region36
          $region35: #{nonlocal_forward_pallas.1} parent=31 // pred_region
            // Predicated region
            $region37: #{nonlocal_forward_pallas.1} parent=35 // pred_check
              _
            $region38: #{nonlocal_forward_pallas.1} parent=35 // pred_check_branch
              %265 = sbr.rel target = $region40
            $region39: #{nonlocal_forward_pallas.1} parent=35 // pred_region
              // Predicated region
              $region52: #{nonlocal_forward_pallas.1} parent=39 // pred_check
                _
              $region53: #{nonlocal_forward_pallas.1} parent=39 // pred_check_branch
                %311 = sbr.rel (0) target = $region55
              $region54: #{nonlocal_forward_pallas.1} parent=39 // pred_region
                loop: start=0, step=1, limit=1
                $region56: #{nonlocal_forward_pallas.1} parent=54 // loop_pre_header
                  _
                $region57: #{nonlocal_forward_pallas.1} parent=54 // loop_header
                  %s313 = sphi 0, %s317
                  %p314 = scmp.ge.s32.totalorder %s313, 1
                  %s318 = sphi %s261, %s261
                  %s319 = sphi %s257, %s257
                $region58: #{nonlocal_forward_pallas.1} parent=54 // loop_header_branch
                  %316 = sbr.rel (%p314) target = $region62
                $region59: #{nonlocal_forward_pallas.1} parent=54 // loop_body
                  _
                $region60: #{nonlocal_forward_pallas.1} parent=54 // loop_footer
                  %s317 = sadd.s32 1, %s313
                $region61: #{nonlocal_forward_pallas.1} parent=54 // loop_footer_branch
                  %312 = sbr.rel target = $region57
                $region62: #{nonlocal_forward_pallas.1} parent=54 // loop_exit
                  _
                %s321 = ssub.s32 16, 1
                loop: start=0, step=1, limit=1
                $region63: #{nonlocal_forward_pallas.1} parent=54 // loop_pre_header
                  _
                $region64: #{nonlocal_forward_pallas.1} parent=54 // loop_header
                  %s323 = sphi 0, %s327
                  %p324 = scmp.ge.s32.totalorder %s323, 1
                  %s328 = sphi %s261, %s261
                  %s329 = sphi %s257, %s257
                $region65: #{nonlocal_forward_pallas.1} parent=54 // loop_header_branch
                  %326 = sbr.rel (%p324) target = $region69
                $region66: #{nonlocal_forward_pallas.1} parent=54 // loop_body
                  %v330 = vld [vmem:[%s328] sm:%s321]
                  %331 = vst [vmem:[%s329] sm:%s321] %v330
                  %v332 = vld [vmem:[%s328 + $0x8] sm:%s321]
                  %333 = vst [vmem:[%s329 + $0x4] sm:%s321] %v332
                  %v334 = vld [vmem:[%s328 + $0x10] sm:%s321]
                  %335 = vst [vmem:[%s329 + $0x8] sm:%s321] %v334
                  %v336 = vld [vmem:[%s328 + $0x18] sm:%s321]
                  %337 = vst [vmem:[%s329 + $0xc] sm:%s321] %v336
                  %v338 = vld [vmem:[%s328 + $0x20] sm:%s321]
                  %339 = vst [vmem:[%s329 + $0x10] sm:%s321] %v338
                  %v340 = vld [vmem:[%s328 + $0x28] sm:%s321]
                  %341 = vst [vmem:[%s329 + $0x14] sm:%s321] %v340
                  %v342 = vld [vmem:[%s328 + $0x30] sm:%s321]
                  %343 = vst [vmem:[%s329 + $0x18] sm:%s321] %v342
                  %v344 = vld [vmem:[%s328 + $0x38] sm:%s321]
                  %345 = vst [vmem:[%s329 + $0x1c] sm:%s321] %v344
                  %v346 = vld [vmem:[%s328 + $0x40] sm:%s321]
                  %347 = vst [vmem:[%s329 + $0x20] sm:%s321] %v346
                  %v348 = vld [vmem:[%s328 + $0x48] sm:%s321]
                  %349 = vst [vmem:[%s329 + $0x24] sm:%s321] %v348
                  %v350 = vld [vmem:[%s328 + $0x50] sm:%s321]
                  %351 = vst [vmem:[%s329 + $0x28] sm:%s321] %v350
                  %v352 = vld [vmem:[%s328 + $0x58] sm:%s321]
                  %353 = vst [vmem:[%s329 + $0x2c] sm:%s321] %v352
                  %v354 = vld [vmem:[%s328 + $0x60] sm:%s321]
                  %355 = vst [vmem:[%s329 + $0x30] sm:%s321] %v354
                  %v356 = vld [vmem:[%s328 + $0x68] sm:%s321]
                  %357 = vst [vmem:[%s329 + $0x34] sm:%s321] %v356
                  %v358 = vld [vmem:[%s328 + $0x70] sm:%s321]
                  %359 = vst [vmem:[%s329 + $0x38] sm:%s321] %v358
                  %v360 = vld [vmem:[%s328 + $0x78] sm:%s321]
                  %361 = vst [vmem:[%s329 + $0x3c] sm:%s321] %v360
                $region67: #{nonlocal_forward_pallas.1} parent=54 // loop_footer
                  %s327 = sadd.s32 1, %s323
                $region68: #{nonlocal_forward_pallas.1} parent=54 // loop_footer_branch
                  %322 = sbr.rel target = $region64
                $region69: #{nonlocal_forward_pallas.1} parent=54 // loop_exit
                  _
              $region55: #{nonlocal_forward_pallas.1} parent=39 // pred_fallthru
                _
            $region40: #{nonlocal_forward_pallas.1} parent=35 // pred_fallthru
              _
            // Predicated region
            $region41: #{nonlocal_forward_pallas.1} parent=35 // pred_check
              _
            $region42: #{nonlocal_forward_pallas.1} parent=35 // pred_check_branch
              %267 = sbr.rel (0) target = $region44
            $region43: #{nonlocal_forward_pallas.1} parent=35 // pred_region
              %s269 = ssub.s32 16, 1
              loop: start=0, step=1, limit=1
              $region45: #{nonlocal_forward_pallas.1} parent=43 // loop_pre_header
                _
              $region46: #{nonlocal_forward_pallas.1} parent=43 // loop_header
                %s271 = sphi 0, %s275
                %p272 = scmp.ge.s32.totalorder %s271, 1
                %s276 = sphi %s261, %s261
                %s277 = sphi %s257, %s257
              $region47: #{nonlocal_forward_pallas.1} parent=43 // loop_header_branch
                %274 = sbr.rel (%p272) target = $region51
              $region48: #{nonlocal_forward_pallas.1} parent=43 // loop_body
                %v278 = vld [vmem:[%s276] sm:%s269]
                %279 = vst [vmem:[%s277] sm:%s269] %v278
                %v280 = vld [vmem:[%s276 + $0x8] sm:%s269]
                %281 = vst [vmem:[%s277 + $0x4] sm:%s269] %v280
                %v282 = vld [vmem:[%s276 + $0x10] sm:%s269]
                %283 = vst [vmem:[%s277 + $0x8] sm:%s269] %v282
                %v284 = vld [vmem:[%s276 + $0x18] sm:%s269]
                %285 = vst [vmem:[%s277 + $0xc] sm:%s269] %v284
                %v286 = vld [vmem:[%s276 + $0x20] sm:%s269]
                %287 = vst [vmem:[%s277 + $0x10] sm:%s269] %v286
                %v288 = vld [vmem:[%s276 + $0x28] sm:%s269]
                %289 = vst [vmem:[%s277 + $0x14] sm:%s269] %v288
                %v290 = vld [vmem:[%s276 + $0x30] sm:%s269]
                %291 = vst [vmem:[%s277 + $0x18] sm:%s269] %v290
                %v292 = vld [vmem:[%s276 + $0x38] sm:%s269]
                %293 = vst [vmem:[%s277 + $0x1c] sm:%s269] %v292
                %v294 = vld [vmem:[%s276 + $0x40] sm:%s269]
                %295 = vst [vmem:[%s277 + $0x20] sm:%s269] %v294
                %v296 = vld [vmem:[%s276 + $0x48] sm:%s269]
                %297 = vst [vmem:[%s277 + $0x24] sm:%s269] %v296
                %v298 = vld [vmem:[%s276 + $0x50] sm:%s269]
                %299 = vst [vmem:[%s277 + $0x28] sm:%s269] %v298
                %v300 = vld [vmem:[%s276 + $0x58] sm:%s269]
                %301 = vst [vmem:[%s277 + $0x2c] sm:%s269] %v300
                %v302 = vld [vmem:[%s276 + $0x60] sm:%s269]
                %303 = vst [vmem:[%s277 + $0x30] sm:%s269] %v302
                %v304 = vld [vmem:[%s276 + $0x68] sm:%s269]
                %305 = vst [vmem:[%s277 + $0x34] sm:%s269] %v304
                %v306 = vld [vmem:[%s276 + $0x70] sm:%s269]
                %307 = vst [vmem:[%s277 + $0x38] sm:%s269] %v306
                %v308 = vld [vmem:[%s276 + $0x78] sm:%s269]
                %309 = vst [vmem:[%s277 + $0x3c] sm:%s269] %v308
              $region49: #{nonlocal_forward_pallas.1} parent=43 // loop_footer
                %s275 = sadd.s32 1, %s271
              $region50: #{nonlocal_forward_pallas.1} parent=43 // loop_footer_branch
                %270 = sbr.rel target = $region46
              $region51: #{nonlocal_forward_pallas.1} parent=43 // loop_exit
                _
            $region44: #{nonlocal_forward_pallas.1} parent=35 // pred_fallthru
              _
          $region36: #{nonlocal_forward_pallas.1} parent=31 // pred_fallthru
            _
          %362 = vnop
        $region32: #{nonlocal_forward_pallas.1} parent=23 // pred_fallthru
          _
        // Predicated region
        $region70: #{nonlocal_forward_pallas.1} parent=23 // pred_check
          %p363 = pneg %p109
        $region71: #{nonlocal_forward_pallas.1} parent=23 // pred_check_branch
          %365 = sbr.rel (%p363) target = $region73
        $region72: #{nonlocal_forward_pallas.1} parent=23 // pred_region
          %s366 = smul.u32 16, %s21
          %p367 = scmp.lt.s32.totalorder %s19, 1
          %s368 = scalar_select %p367, %s19, 1
          %p369 = scmp.lt.s32.totalorder %s366, 31
          %s370 = scalar_select %p369, %s366, 31
          %s371 = smul.addr %s368, 32
          %s372 = sadd.s32 %s370, %s371
          %s373 = smul.addr %s372, 4
          %s374 = scalar_lea.vmem %s2, %s373
          %s375 = smul.u32 16, %s21
        $region73: #{nonlocal_forward_pallas.1} parent=23 // pred_fallthru
          _
        // Predicated region
        $region74: #{nonlocal_forward_pallas.1} parent=23 // pred_check
          %p376 = pneg %p137
        $region75: #{nonlocal_forward_pallas.1} parent=23 // pred_check_branch
          %378 = sbr.rel (%p376) target = $region77
        $region76: #{nonlocal_forward_pallas.1} parent=23 // pred_region
          %s379 = smul.u32 16, %s20
          %p380 = scmp.lt.s32.totalorder %s19, 1
          %s381 = scalar_select %p380, %s19, 1
          %p382 = scmp.lt.s32.totalorder %s379, 31
          %s383 = scalar_select %p382, %s379, 31
          %s384 = smul.addr %s381, 32
          %s385 = sadd.s32 %s383, %s384
          %s386 = smul.addr %s385, 8
          %s387 = scalar_lea.vmem %s3, %s386
          %s388 = smul.u32 16, %s20
        $region77: #{nonlocal_forward_pallas.1} parent=23 // pred_fallthru
          _
      $region24: #{nonlocal_forward_pallas.1} parent=5 // pred_fallthru
        _
      %p389 = scmp.le.s32.totalorder 1, %s12
      %p390 = scmp.lt.s32.totalorder %s12, 9
      %p391 = pnand %p389, %p390
      %p392 = pneg %p391
      // Predicated region
      $region78: #{nonlocal_forward_pallas.1} parent=5 // pred_check
        _
      $region79: #{nonlocal_forward_pallas.1} parent=5 // pred_check_branch
        %394 = sbr.rel (%p391) target = $region81
      $region80: #{nonlocal_forward_pallas.1} parent=5 // pred_region
        %s395 = ssub.s32 %s12, 1
        %s396 = sand.u32 %s74, 1
        %s397 = sand.u32 %s74, 1
        %s398 = smul.addr %s397, 64
        %s399 = scalar_lea.vmem [#allocation5], %s398
        // Predicated region
        $region82: #{nonlocal_forward_pallas.1} parent=80 // pred_check
          %p400 = pneg %p87
        $region83: #{nonlocal_forward_pallas.1} parent=80 // pred_check_branch
          %402 = sbr.rel (%p400) target = $region85
        $region84: #{nonlocal_forward_pallas.1} parent=80 // pred_region
          _
        $region85: #{nonlocal_forward_pallas.1} parent=80 // pred_fallthru
          _
        %s403 = smul.u32 16, %s23
        %p404 = scmp.lt.s32.totalorder %s22, 1
        %s405 = scalar_select %p404, %s22, 1
        %p406 = scmp.lt.s32.totalorder %s403, 31
        %s407 = scalar_select %p406, %s403, 31
        %s408 = smul.addr %s405, 32
        %s409 = sadd.s32 %s407, %s408
        %s410 = smul.addr %s409, 4
        %s411 = scalar_lea.vmem %s0, %s410
        %p412 = pneg %p59
        %p413 = pneg %p56
        %s414 = sand.u32 %s74, 1
        %s415 = sand.u32 %s74, 1
        %s416 = smul.addr %s415, 64
        %s417 = scalar_lea.vmem [#allocation5], %s416
        %p418 = pneg %p87
        %p419 = pneg %p84
        %s420 = smul.u32 16, %s24
        %p421 = scmp.lt.s32.totalorder %s22, 1
        %s422 = scalar_select %p421, %s22, 1
        %p423 = scmp.lt.s32.totalorder %s420, 31
        %s424 = scalar_select %p423, %s420, 31
        %s425 = smul.addr %s422, 32
        %s426 = sadd.s32 %s424, %s425
        %s427 = smul.addr %s426, 4
        %s428 = scalar_lea.vmem %s2, %s427
        %p429 = pneg %p115
        %p430 = pneg %p112
        %s431 = smul.u32 16, %s23
        %p432 = scmp.lt.s32.totalorder %s22, 1
        %s433 = scalar_select %p432, %s22, 1
        %p434 = scmp.lt.s32.totalorder %s431, 31
        %s435 = scalar_select %p434, %s431, 31
        %s436 = smul.addr %s433, 32
        %s437 = sadd.s32 %s435, %s436
        %s438 = smul.addr %s437, 8
        %s439 = scalar_lea.vmem %s3, %s438
        %p440 = pneg %p143
        %p441 = pneg %p140
        %p442 = pneg %p164
        %p443 = pneg %p161
        %p444 = pneg %p185
        %p445 = pneg %p182
        %p446 = pneg %p213
        %p447 = pneg %p210
        %s448 = smul.u32 16, %s23
        %p449 = scmp.lt.s32.totalorder %s22, 1
        %s450 = scalar_select %p449, %s22, 1
        %p451 = scmp.lt.s32.totalorder %s448, 31
        %s452 = scalar_select %p451, %s448, 31
        %s453 = smul.addr %s450, 32
        %s454 = sadd.s32 %s452, %s453
        %s455 = smul.addr %s454, 8
        %s456 = scalar_lea.vmem %s6, %s455
        %s457 = smul.u32 16, %s23
        %p458 = scmp.lt.s32.totalorder %s22, 1
        %s459 = scalar_select %p458, %s22, 1
        %p460 = scmp.lt.s32.totalorder %s457, 31
        %s461 = scalar_select %p460, %s457, 31
        %s462 = smul.addr %s459, 32
        %s463 = sadd.s32 %s461, %s462
        %s464 = smul.addr %s463, 4
        %s465 = scalar_lea.vmem %s0, %s464
        %s466 = smul.u32 16, %s23
        %s467 = smul.u32 16, %s24
        %p468 = scmp.lt.s32.totalorder %s22, 1
        %s469 = scalar_select %p468, %s22, 1
        %p470 = scmp.lt.s32.totalorder %s467, 31
        %s471 = scalar_select %p470, %s467, 31
        %s472 = smul.addr %s469, 32
        %s473 = sadd.s32 %s471, %s472
        %s474 = smul.addr %s473, 4
        %s475 = scalar_lea.vmem %s2, %s474
        %s476 = smul.u32 16, %s24
        %s477 = smul.u32 16, %s23
        %p478 = scmp.lt.s32.totalorder %s22, 1
        %s479 = scalar_select %p478, %s22, 1
        %p480 = scmp.lt.s32.totalorder %s477, 31
        %s481 = scalar_select %p480, %s477, 31
        %s482 = smul.addr %s479, 32
        %s483 = sadd.s32 %s481, %s482
        %s484 = smul.addr %s483, 8
        %s485 = scalar_lea.vmem %s3, %s484
        %s486 = smul.u32 16, %s23
        %s487 = smul.u32 16, %s23
        %p488 = scmp.lt.s32.totalorder %s22, 1
        %s489 = scalar_select %p488, %s22, 1
        %p490 = scmp.lt.s32.totalorder %s487, 31
        %s491 = scalar_select %p490, %s487, 31
        %s492 = smul.addr %s489, 32
        %s493 = sadd.s32 %s491, %s492
        %s494 = smul.addr %s493, 8
        %s495 = scalar_lea.vmem %s6, %s494
        %s496 = smul.u32 16, %s23
        %p497 = scmp.eq.s32.totalorder %s24, 0
        // Predicated region
        $region86: #{nonlocal_forward_pallas.1} parent=80 // pred_check
          %p498 = pneg %p497
        $region87: #{nonlocal_forward_pallas.1} parent=80 // pred_check_branch
          %500 = sbr.rel (%p498) target = $region89
        $region88: #{nonlocal_forward_pallas.1} parent=80 // pred_region
          %vm501 = vcmask 7168
          %502 = vst.msk [vmem:[#allocation2] sm:$0xff] %vm501, -inf
          %503 = vst.msk [vmem:[#allocation2 + $0x8] sm:$0xff] %vm501, -inf
          %504 = vst.msk [vmem:[#allocation2 + $0x10] sm:$0xff] %vm501, -inf
          %505 = vst.msk [vmem:[#allocation2 + $0x18] sm:$0xff] %vm501, -inf
          %506 = vst.msk [vmem:[#allocation2 + $0x20] sm:$0xff] %vm501, -inf
          %507 = vst.msk [vmem:[#allocation2 + $0x28] sm:$0xff] %vm501, -inf
          %508 = vst.msk [vmem:[#allocation2 + $0x30] sm:$0xff] %vm501, -inf
          %509 = vst.msk [vmem:[#allocation2 + $0x38] sm:$0xff] %vm501, -inf
          %510 = vst.msk [vmem:[#allocation2 + $0x40] sm:$0xff] %vm501, -inf
          %511 = vst.msk [vmem:[#allocation2 + $0x48] sm:$0xff] %vm501, -inf
          %512 = vst.msk [vmem:[#allocation2 + $0x50] sm:$0xff] %vm501, -inf
          %513 = vst.msk [vmem:[#allocation2 + $0x58] sm:$0xff] %vm501, -inf
          %514 = vst.msk [vmem:[#allocation2 + $0x60] sm:$0xff] %vm501, -inf
          %515 = vst.msk [vmem:[#allocation2 + $0x68] sm:$0xff] %vm501, -inf
          %516 = vst.msk [vmem:[#allocation2 + $0x70] sm:$0xff] %vm501, -inf
          %517 = vst.msk [vmem:[#allocation2 + $0x78] sm:$0xff] %vm501, -inf
          %518 = vst.msk [vmem:[#allocation3] sm:$0xff] %vm501, 0.0
          %519 = vst.msk [vmem:[#allocation3 + $0x8] sm:$0xff] %vm501, 0.0
          %520 = vst.msk [vmem:[#allocation3 + $0x10] sm:$0xff] %vm501, 0.0
          %521 = vst.msk [vmem:[#allocation3 + $0x18] sm:$0xff] %vm501, 0.0
          %522 = vst.msk [vmem:[#allocation3 + $0x20] sm:$0xff] %vm501, 0.0
          %523 = vst.msk [vmem:[#allocation3 + $0x28] sm:$0xff] %vm501, 0.0
          %524 = vst.msk [vmem:[#allocation3 + $0x30] sm:$0xff] %vm501, 0.0
          %525 = vst.msk [vmem:[#allocation3 + $0x38] sm:$0xff] %vm501, 0.0
          %526 = vst.msk [vmem:[#allocation3 + $0x40] sm:$0xff] %vm501, 0.0
          %527 = vst.msk [vmem:[#allocation3 + $0x48] sm:$0xff] %vm501, 0.0
          %528 = vst.msk [vmem:[#allocation3 + $0x50] sm:$0xff] %vm501, 0.0
          %529 = vst.msk [vmem:[#allocation3 + $0x58] sm:$0xff] %vm501, 0.0
          %530 = vst.msk [vmem:[#allocation3 + $0x60] sm:$0xff] %vm501, 0.0
          %531 = vst.msk [vmem:[#allocation3 + $0x68] sm:$0xff] %vm501, 0.0
          %532 = vst.msk [vmem:[#allocation3 + $0x70] sm:$0xff] %vm501, 0.0
          %533 = vst.msk [vmem:[#allocation3 + $0x78] sm:$0xff] %vm501, 0.0
          %534 = vst [vmem:[#allocation4] sm:$0xff] 0.0
          %535 = vst [vmem:[#allocation4 + $0x8] sm:$0xff] 0.0
          %536 = vst [vmem:[#allocation4 + $0x10] sm:$0xff] 0.0
          %537 = vst [vmem:[#allocation4 + $0x18] sm:$0xff] 0.0
          %538 = vst [vmem:[#allocation4 + $0x20] sm:$0xff] 0.0
          %539 = vst [vmem:[#allocation4 + $0x28] sm:$0xff] 0.0
          %540 = vst [vmem:[#allocation4 + $0x30] sm:$0xff] 0.0
          %541 = vst [vmem:[#allocation4 + $0x38] sm:$0xff] 0.0
          %542 = vst [vmem:[#allocation4 + $0x40] sm:$0xff] 0.0
          %543 = vst [vmem:[#allocation4 + $0x48] sm:$0xff] 0.0
          %544 = vst [vmem:[#allocation4 + $0x50] sm:$0xff] 0.0
          %545 = vst [vmem:[#allocation4 + $0x58] sm:$0xff] 0.0
          %546 = vst [vmem:[#allocation4 + $0x60] sm:$0xff] 0.0
          %547 = vst [vmem:[#allocation4 + $0x68] sm:$0xff] 0.0
          %548 = vst [vmem:[#allocation4 + $0x70] sm:$0xff] 0.0
          %549 = vst [vmem:[#allocation4 + $0x78] sm:$0xff] 0.0
        $region89: #{nonlocal_forward_pallas.1} parent=80 // pred_fallthru
          _
        %v550 = vld [vmem:[%s465] sm:$0xf]
        %v551 = vld [vmem:[%s465 + $0x4] sm:$0xf]
        %v552 = vld [vmem:[%s465 + $0x8] sm:$0xf]
        %v553 = vld [vmem:[%s465 + $0xc] sm:$0xf]
        %v554 = vld [vmem:[%s465 + $0x10] sm:$0xf]
        %v555 = vld [vmem:[%s465 + $0x14] sm:$0xf]
        %v556 = vld [vmem:[%s465 + $0x18] sm:$0xf]
        %v557 = vld [vmem:[%s465 + $0x1c] sm:$0xf]
        %v558 = vld [vmem:[%s465 + $0x20] sm:$0xf]
        %v559 = vld [vmem:[%s465 + $0x24] sm:$0xf]
        %v560 = vld [vmem:[%s465 + $0x28] sm:$0xf]
        %v561 = vld [vmem:[%s465 + $0x2c] sm:$0xf]
        %v562 = vld [vmem:[%s465 + $0x30] sm:$0xf]
        %v563 = vld [vmem:[%s465 + $0x34] sm:$0xf]
        %v564 = vld [vmem:[%s465 + $0x38] sm:$0xf]
        %v565 = vld [vmem:[%s465 + $0x3c] sm:$0xf]
        %v566 = vld [vmem:[%s399] sm:$0xf]
        %v567 = vld [vmem:[%s399 + $0x4] sm:$0xf]
        %v568 = vld [vmem:[%s399 + $0x8] sm:$0xf]
        %v569 = vld [vmem:[%s399 + $0xc] sm:$0xf]
        %v570 = vld [vmem:[%s399 + $0x10] sm:$0xf]
        %v571 = vld [vmem:[%s399 + $0x14] sm:$0xf]
        %v572 = vld [vmem:[%s399 + $0x18] sm:$0xf]
        %v573 = vld [vmem:[%s399 + $0x1c] sm:$0xf]
        %v574 = vld [vmem:[%s399 + $0x20] sm:$0xf]
        %v575 = vld [vmem:[%s399 + $0x24] sm:$0xf]
        %v576 = vld [vmem:[%s399 + $0x28] sm:$0xf]
        %v577 = vld [vmem:[%s399 + $0x2c] sm:$0xf]
        %v578 = vld [vmem:[%s399 + $0x30] sm:$0xf]
        %v579 = vld [vmem:[%s399 + $0x34] sm:$0xf]
        %v580 = vld [vmem:[%s399 + $0x38] sm:$0xf]
        %v581 = vld [vmem:[%s399 + $0x3c] sm:$0xf]
        %v582 = vld [vmem:[%s475] sm:$0xf]
        %v583 = vld [vmem:[%s475 + $0x4] sm:$0xf]
        %v584 = vld [vmem:[%s475 + $0x8] sm:$0xf]
        %v585 = vld [vmem:[%s475 + $0xc] sm:$0xf]
        %v586 = vld [vmem:[%s475 + $0x10] sm:$0xf]
        %v587 = vld [vmem:[%s475 + $0x14] sm:$0xf]
        %v588 = vld [vmem:[%s475 + $0x18] sm:$0xf]
        %v589 = vld [vmem:[%s475 + $0x1c] sm:$0xf]
        %v590 = vld [vmem:[%s475 + $0x20] sm:$0xf]
        %v591 = vld [vmem:[%s475 + $0x24] sm:$0xf]
        %v592 = vld [vmem:[%s475 + $0x28] sm:$0xf]
        %v593 = vld [vmem:[%s475 + $0x2c] sm:$0xf]
        %v594 = vld [vmem:[%s475 + $0x30] sm:$0xf]
        %v595 = vld [vmem:[%s475 + $0x34] sm:$0xf]
        %v596 = vld [vmem:[%s475 + $0x38] sm:$0xf]
        %v597 = vld [vmem:[%s475 + $0x3c] sm:$0xf]
        %v614 = vunpack.c.l.b16 %v550
        %v615 = vunpack.c.l.b16 %v551
        %v616 = vunpack.c.l.b16 %v552
        %v617 = vunpack.c.l.b16 %v553
        %v618 = vunpack.c.l.b16 %v554
        %v619 = vunpack.c.l.b16 %v555
        %v620 = vunpack.c.l.b16 %v556
        %v621 = vunpack.c.l.b16 %v557
        %v622 = vunpack.c.l.b16 %v558
        %v623 = vunpack.c.l.b16 %v559
        %v624 = vunpack.c.l.b16 %v560
        %v625 = vunpack.c.l.b16 %v561
        %v626 = vunpack.c.l.b16 %v562
        %v627 = vunpack.c.l.b16 %v563
        %v628 = vunpack.c.l.b16 %v564
        %v629 = vunpack.c.l.b16 %v565
        %v630 = vpack.c.b16 %v615, %v614
        %v631 = vpack.c.b16 %v617, %v616
        %v632 = vpack.c.b16 %v619, %v618
        %v633 = vpack.c.b16 %v621, %v620
        %v634 = vpack.c.b16 %v623, %v622
        %v635 = vpack.c.b16 %v625, %v624
        %v636 = vpack.c.b16 %v627, %v626
        %v637 = vpack.c.b16 %v629, %v628
        %v662 = vunpack.c.l.b16 %v566
        %v663 = vunpack.c.l.b16 %v567
        %v664 = vunpack.c.l.b16 %v568
        %v665 = vunpack.c.l.b16 %v569
        %v666 = vunpack.c.l.b16 %v570
        %v667 = vunpack.c.l.b16 %v571
        %v668 = vunpack.c.l.b16 %v572
        %v669 = vunpack.c.l.b16 %v573
        %v670 = vunpack.c.l.b16 %v574
        %v671 = vunpack.c.l.b16 %v575
        %v672 = vunpack.c.l.b16 %v576
        %v673 = vunpack.c.l.b16 %v577
        %v674 = vunpack.c.l.b16 %v578
        %v675 = vunpack.c.l.b16 %v579
        %v676 = vunpack.c.l.b16 %v580
        %v677 = vunpack.c.l.b16 %v581
        %v678 = vpack.c.b16 %v663, %v662
        %v679 = vpack.c.b16 %v665, %v664
        %v680 = vpack.c.b16 %v667, %v666
        %v681 = vpack.c.b16 %v669, %v668
        %v682 = vpack.c.b16 %v671, %v670
        %v683 = vpack.c.b16 %v673, %v672
        %v684 = vpack.c.b16 %v675, %v674
        %v685 = vpack.c.b16 %v677, %v676
        %694 = vmatpush.bf16.msra.mxu0 %v685
        %695 = vmatpush.bf16.msra.mxu0 %v684
        %696 = vmatpush.bf16.msra.mxu0 %v683
        %697 = vmatpush.bf16.msra.mxu0 %v682
        %698 = vmatpush.bf16.msra.mxu0 %v681
        %699 = vmatpush.bf16.msra.mxu0 %v680
        %700 = vmatpush.bf16.msra.mxu0 %v679
        %701 = vmatpush.bf16.msra.mxu0 %v678
        %702 = vmatmul.bf16.gmra.mxu0 %v630
        %v703 = vpop.f32.mrf.mxu0
        %v704 = vadd.f32 0.0, %v703
        %v705 = vpop.f32.mrf.mxu0
        %v706 = vadd.f32 0.0, %v705
        %707 = vmatmul.bf16.gmra.mxu0 %v631
        %v708 = vpop.f32.mrf.mxu0
        %v709 = vadd.f32 0.0, %v708
        %v710 = vpop.f32.mrf.mxu0
        %v711 = vadd.f32 0.0, %v710
        %712 = vmatmul.bf16.gmra.mxu0 %v632
        %v713 = vpop.f32.mrf.mxu0
        %v714 = vadd.f32 0.0, %v713
        %v715 = vpop.f32.mrf.mxu0
        %v716 = vadd.f32 0.0, %v715
        %717 = vmatmul.bf16.gmra.mxu0 %v633
        %v718 = vpop.f32.mrf.mxu0
        %v719 = vadd.f32 0.0, %v718
        %v720 = vpop.f32.mrf.mxu0
        %v721 = vadd.f32 0.0, %v720
        %722 = vmatmul.bf16.gmra.mxu0 %v634
        %v723 = vpop.f32.mrf.mxu0
        %v724 = vadd.f32 0.0, %v723
        %v725 = vpop.f32.mrf.mxu0
        %v726 = vadd.f32 0.0, %v725
        %727 = vmatmul.bf16.gmra.mxu0 %v635
        %v728 = vpop.f32.mrf.mxu0
        %v729 = vadd.f32 0.0, %v728
        %v730 = vpop.f32.mrf.mxu0
        %v731 = vadd.f32 0.0, %v730
        %732 = vmatmul.bf16.gmra.mxu0 %v636
        %v733 = vpop.f32.mrf.mxu0
        %v734 = vadd.f32 0.0, %v733
        %v735 = vpop.f32.mrf.mxu0
        %v736 = vadd.f32 0.0, %v735
        %737 = vmatmul.bf16.gmra.mxu0 %v637
        %v738 = vpop.f32.mrf.mxu0
        %v739 = vadd.f32 0.0, %v738
        %v740 = vpop.f32.mrf.mxu0
        %v741 = vadd.f32 0.0, %v740
        %742 = vdwg.mxu0
        %v743 = vld [vmem:[#allocation2] sm:$0xff]
        %v744 = vld [vmem:[#allocation2 + $0x8] sm:$0xff]
        %v745 = vld [vmem:[#allocation2 + $0x10] sm:$0xff]
        %v746 = vld [vmem:[#allocation2 + $0x18] sm:$0xff]
        %v747 = vld [vmem:[#allocation2 + $0x20] sm:$0xff]
        %v748 = vld [vmem:[#allocation2 + $0x28] sm:$0xff]
        %v749 = vld [vmem:[#allocation2 + $0x30] sm:$0xff]
        %v750 = vld [vmem:[#allocation2 + $0x38] sm:$0xff]
        %v751 = vld [vmem:[#allocation2 + $0x40] sm:$0xff]
        %v752 = vld [vmem:[#allocation2 + $0x48] sm:$0xff]
        %v753 = vld [vmem:[#allocation2 + $0x50] sm:$0xff]
        %v754 = vld [vmem:[#allocation2 + $0x58] sm:$0xff]
        %v755 = vld [vmem:[#allocation2 + $0x60] sm:$0xff]
        %v756 = vld [vmem:[#allocation2 + $0x68] sm:$0xff]
        %v757 = vld [vmem:[#allocation2 + $0x70] sm:$0xff]
        %v758 = vld [vmem:[#allocation2 + $0x78] sm:$0xff]
        %759 = vmax.xlane.f32.xlu0 %v704
        %v760 = vpop.xlane.xlu0 %759
        %761 = vmax.xlane.f32.xlu0 %v706
        %v762 = vpop.xlane.xlu0 %761
        %763 = vmax.xlane.f32.xlu0 %v709
        %v764 = vpop.xlane.xlu0 %763
        %765 = vmax.xlane.f32.xlu0 %v711
        %v766 = vpop.xlane.xlu0 %765
        %767 = vmax.xlane.f32.xlu0 %v714
        %v768 = vpop.xlane.xlu0 %767
        %769 = vmax.xlane.f32.xlu0 %v716
        %v770 = vpop.xlane.xlu0 %769
        %771 = vmax.xlane.f32.xlu0 %v719
        %v772 = vpop.xlane.xlu0 %771
        %773 = vmax.xlane.f32.xlu0 %v721
        %v774 = vpop.xlane.xlu0 %773
        %775 = vmax.xlane.f32.xlu0 %v724
        %v776 = vpop.xlane.xlu0 %775
        %777 = vmax.xlane.f32.xlu0 %v726
        %v778 = vpop.xlane.xlu0 %777
        %779 = vmax.xlane.f32.xlu0 %v729
        %v780 = vpop.xlane.xlu0 %779
        %781 = vmax.xlane.f32.xlu0 %v731
        %v782 = vpop.xlane.xlu0 %781
        %783 = vmax.xlane.f32.xlu0 %v734
        %v784 = vpop.xlane.xlu0 %783
        %785 = vmax.xlane.f32.xlu0 %v736
        %v786 = vpop.xlane.xlu0 %785
        %787 = vmax.xlane.f32.xlu0 %v739
        %v788 = vpop.xlane.xlu0 %787
        %789 = vmax.xlane.f32.xlu0 %v741
        %v790 = vpop.xlane.xlu0 %789
        %v791 = vmax.f32 %v743, %v760
        %v792 = vmax.f32 %v744, %v762
        %v793 = vmax.f32 %v745, %v764
        %v794 = vmax.f32 %v746, %v766
        %v795 = vmax.f32 %v747, %v768
        %v796 = vmax.f32 %v748, %v770
        %v797 = vmax.f32 %v749, %v772
        %v798 = vmax.f32 %v750, %v774
        %v799 = vmax.f32 %v751, %v776
        %v800 = vmax.f32 %v752, %v778
        %v801 = vmax.f32 %v753, %v780
        %v802 = vmax.f32 %v754, %v782
        %v803 = vmax.f32 %v755, %v784
        %v804 = vmax.f32 %v756, %v786
        %v805 = vmax.f32 %v757, %v788
        %v806 = vmax.f32 %v758, %v790
        %v807 = vsub.f32 %v743, %v791
        %v808 = vsub.f32 %v744, %v792
        %v809 = vsub.f32 %v745, %v793
        %v810 = vsub.f32 %v746, %v794
        %v811 = vsub.f32 %v747, %v795
        %v812 = vsub.f32 %v748, %v796
        %v813 = vsub.f32 %v749, %v797
        %v814 = vsub.f32 %v750, %v798
        %v815 = vsub.f32 %v751, %v799
        %v816 = vsub.f32 %v752, %v800
        %v817 = vsub.f32 %v753, %v801
        %v818 = vsub.f32 %v754, %v802
        %v819 = vsub.f32 %v755, %v803
        %v820 = vsub.f32 %v756, %v804
        %v821 = vsub.f32 %v757, %v805
        %v822 = vsub.f32 %v758, %v806
        %v823 = vmul.f32 %v807, 1.442695
        %v824 = vpow.pop %v823
        %v825 = vmul.f32 %v808, 1.442695
        %v826 = vpow.pop %v825
        %v827 = vmul.f32 %v809, 1.442695
        %v828 = vpow.pop %v827
        %v829 = vmul.f32 %v810, 1.442695
        %v830 = vpow.pop %v829
        %v831 = vmul.f32 %v811, 1.442695
        %v832 = vpow.pop %v831
        %v833 = vmul.f32 %v812, 1.442695
        %v834 = vpow.pop %v833
        %v835 = vmul.f32 %v813, 1.442695
        %v836 = vpow.pop %v835
        %v837 = vmul.f32 %v814, 1.442695
        %v838 = vpow.pop %v837
        %v839 = vmul.f32 %v815, 1.442695
        %v840 = vpow.pop %v839
        %v841 = vmul.f32 %v816, 1.442695
        %v842 = vpow.pop %v841
        %v843 = vmul.f32 %v817, 1.442695
        %v844 = vpow.pop %v843
        %v845 = vmul.f32 %v818, 1.442695
        %v846 = vpow.pop %v845
        %v847 = vmul.f32 %v819, 1.442695
        %v848 = vpow.pop %v847
        %v849 = vmul.f32 %v820, 1.442695
        %v850 = vpow.pop %v849
        %v851 = vmul.f32 %v821, 1.442695
        %v852 = vpow.pop %v851
        %v853 = vmul.f32 %v822, 1.442695
        %v854 = vpow.pop %v853
        %856 = vset.pattern.permute.xlu0 0
        %857 = vperm.xlu0 %856, %v791
        %v858 = vpop.permute.xlu0 %857
        %861 = vset.pattern.permute.xlu0 0
        %862 = vperm.xlu0 %861, %v792
        %v863 = vpop.permute.xlu0 %862
        %866 = vset.pattern.permute.xlu0 0
        %867 = vperm.xlu0 %866, %v793
        %v868 = vpop.permute.xlu0 %867
        %871 = vset.pattern.permute.xlu0 0
        %872 = vperm.xlu0 %871, %v794
        %v873 = vpop.permute.xlu0 %872
        %876 = vset.pattern.permute.xlu0 0
        %877 = vperm.xlu0 %876, %v795
        %v878 = vpop.permute.xlu0 %877
        %881 = vset.pattern.permute.xlu0 0
        %882 = vperm.xlu0 %881, %v796
        %v883 = vpop.permute.xlu0 %882
        %886 = vset.pattern.permute.xlu0 0
        %887 = vperm.xlu0 %886, %v797
        %v888 = vpop.permute.xlu0 %887
        %891 = vset.pattern.permute.xlu0 0
        %892 = vperm.xlu0 %891, %v798
        %v893 = vpop.permute.xlu0 %892
        %896 = vset.pattern.permute.xlu0 0
        %897 = vperm.xlu0 %896, %v799
        %v898 = vpop.permute.xlu0 %897
        %901 = vset.pattern.permute.xlu0 0
        %902 = vperm.xlu0 %901, %v800
        %v903 = vpop.permute.xlu0 %902
        %906 = vset.pattern.permute.xlu0 0
        %907 = vperm.xlu0 %906, %v801
        %v908 = vpop.permute.xlu0 %907
        %911 = vset.pattern.permute.xlu0 0
        %912 = vperm.xlu0 %911, %v802
        %v913 = vpop.permute.xlu0 %912
        %916 = vset.pattern.permute.xlu0 0
        %917 = vperm.xlu0 %916, %v803
        %v918 = vpop.permute.xlu0 %917
        %921 = vset.pattern.permute.xlu0 0
        %922 = vperm.xlu0 %921, %v804
        %v923 = vpop.permute.xlu0 %922
        %926 = vset.pattern.permute.xlu0 0
        %927 = vperm.xlu0 %926, %v805
        %v928 = vpop.permute.xlu0 %927
        %931 = vset.pattern.permute.xlu0 0
        %932 = vperm.xlu0 %931, %v806
        %v933 = vpop.permute.xlu0 %932
        %v935 = vsub.f32 %v704, %v858
        %v936 = vsub.f32 %v706, %v863
        %v937 = vsub.f32 %v709, %v868
        %v938 = vsub.f32 %v711, %v873
        %v939 = vsub.f32 %v714, %v878
        %v940 = vsub.f32 %v716, %v883
        %v941 = vsub.f32 %v719, %v888
        %v942 = vsub.f32 %v721, %v893
        %v943 = vsub.f32 %v724, %v898
        %v944 = vsub.f32 %v726, %v903
        %v945 = vsub.f32 %v729, %v908
        %v946 = vsub.f32 %v731, %v913
        %v947 = vsub.f32 %v734, %v918
        %v948 = vsub.f32 %v736, %v923
        %v949 = vsub.f32 %v739, %v928
        %v950 = vsub.f32 %v741, %v933
        %v951 = vmul.f32 %v935, 1.442695
        %v952 = vpow.pop %v951
        %v953 = vmul.f32 %v936, 1.442695
        %v954 = vpow.pop %v953
        %v955 = vmul.f32 %v937, 1.442695
        %v956 = vpow.pop %v955
        %v957 = vmul.f32 %v938, 1.442695
        %v958 = vpow.pop %v957
        %v959 = vmul.f32 %v939, 1.442695
        %v960 = vpow.pop %v959
        %v961 = vmul.f32 %v940, 1.442695
        %v962 = vpow.pop %v961
        %v963 = vmul.f32 %v941, 1.442695
        %v964 = vpow.pop %v963
        %v965 = vmul.f32 %v942, 1.442695
        %v966 = vpow.pop %v965
        %v967 = vmul.f32 %v943, 1.442695
        %v968 = vpow.pop %v967
        %v969 = vmul.f32 %v944, 1.442695
        %v970 = vpow.pop %v969
        %v971 = vmul.f32 %v945, 1.442695
        %v972 = vpow.pop %v971
        %v973 = vmul.f32 %v946, 1.442695
        %v974 = vpow.pop %v973
        %v975 = vmul.f32 %v947, 1.442695
        %v976 = vpow.pop %v975
        %v977 = vmul.f32 %v948, 1.442695
        %v978 = vpow.pop %v977
        %v979 = vmul.f32 %v949, 1.442695
        %v980 = vpow.pop %v979
        %v981 = vmul.f32 %v950, 1.442695
        %v982 = vpow.pop %v981
        %v983 = vld [vmem:[#allocation3] sm:$0xff]
        %v984 = vld [vmem:[#allocation3 + $0x8] sm:$0xff]
        %v985 = vld [vmem:[#allocation3 + $0x10] sm:$0xff]
        %v986 = vld [vmem:[#allocation3 + $0x18] sm:$0xff]
        %v987 = vld [vmem:[#allocation3 + $0x20] sm:$0xff]
        %v988 = vld [vmem:[#allocation3 + $0x28] sm:$0xff]
        %v989 = vld [vmem:[#allocation3 + $0x30] sm:$0xff]
        %v990 = vld [vmem:[#allocation3 + $0x38] sm:$0xff]
        %v991 = vld [vmem:[#allocation3 + $0x40] sm:$0xff]
        %v992 = vld [vmem:[#allocation3 + $0x48] sm:$0xff]
        %v993 = vld [vmem:[#allocation3 + $0x50] sm:$0xff]
        %v994 = vld [vmem:[#allocation3 + $0x58] sm:$0xff]
        %v995 = vld [vmem:[#allocation3 + $0x60] sm:$0xff]
        %v996 = vld [vmem:[#allocation3 + $0x68] sm:$0xff]
        %v997 = vld [vmem:[#allocation3 + $0x70] sm:$0xff]
        %v998 = vld [vmem:[#allocation3 + $0x78] sm:$0xff]
        %v999 = vmul.f32 %v824, %v983
        %v1000 = vmul.f32 %v826, %v984
        %v1001 = vmul.f32 %v828, %v985
        %v1002 = vmul.f32 %v830, %v986
        %v1003 = vmul.f32 %v832, %v987
        %v1004 = vmul.f32 %v834, %v988
        %v1005 = vmul.f32 %v836, %v989
        %v1006 = vmul.f32 %v838, %v990
        %v1007 = vmul.f32 %v840, %v991
        %v1008 = vmul.f32 %v842, %v992
        %v1009 = vmul.f32 %v844, %v993
        %v1010 = vmul.f32 %v846, %v994
        %v1011 = vmul.f32 %v848, %v995
        %v1012 = vmul.f32 %v850, %v996
        %v1013 = vmul.f32 %v852, %v997
        %v1014 = vmul.f32 %v854, %v998
        %1015 = vadd.xlane.f32.xlu0 %v952
        %v1016 = vpop.xlane.xlu0 %1015
        %1017 = vadd.xlane.f32.xlu0 %v954
        %v1018 = vpop.xlane.xlu0 %1017
        %1019 = vadd.xlane.f32.xlu0 %v956
        %v1020 = vpop.xlane.xlu0 %1019
        %1021 = vadd.xlane.f32.xlu0 %v958
        %v1022 = vpop.xlane.xlu0 %1021
        %1023 = vadd.xlane.f32.xlu0 %v960
        %v1024 = vpop.xlane.xlu0 %1023
        %1025 = vadd.xlane.f32.xlu0 %v962
        %v1026 = vpop.xlane.xlu0 %1025
        %1027 = vadd.xlane.f32.xlu0 %v964
        %v1028 = vpop.xlane.xlu0 %1027
        %1029 = vadd.xlane.f32.xlu0 %v966
        %v1030 = vpop.xlane.xlu0 %1029
        %1031 = vadd.xlane.f32.xlu0 %v968
        %v1032 = vpop.xlane.xlu0 %1031
        %1033 = vadd.xlane.f32.xlu0 %v970
        %v1034 = vpop.xlane.xlu0 %1033
        %1035 = vadd.xlane.f32.xlu0 %v972
        %v1036 = vpop.xlane.xlu0 %1035
        %1037 = vadd.xlane.f32.xlu0 %v974
        %v1038 = vpop.xlane.xlu0 %1037
        %1039 = vadd.xlane.f32.xlu0 %v976
        %v1040 = vpop.xlane.xlu0 %1039
        %1041 = vadd.xlane.f32.xlu0 %v978
        %v1042 = vpop.xlane.xlu0 %1041
        %1043 = vadd.xlane.f32.xlu0 %v980
        %v1044 = vpop.xlane.xlu0 %1043
        %1045 = vadd.xlane.f32.xlu0 %v982
        %v1046 = vpop.xlane.xlu0 %1045
        %v1047 = vadd.f32 %v999, %v1016
        %v1048 = vadd.f32 %v1000, %v1018
        %v1049 = vadd.f32 %v1001, %v1020
        %v1050 = vadd.f32 %v1002, %v1022
        %v1051 = vadd.f32 %v1003, %v1024
        %v1052 = vadd.f32 %v1004, %v1026
        %v1053 = vadd.f32 %v1005, %v1028
        %v1054 = vadd.f32 %v1006, %v1030
        %v1055 = vadd.f32 %v1007, %v1032
        %v1056 = vadd.f32 %v1008, %v1034
        %v1057 = vadd.f32 %v1009, %v1036
        %v1058 = vadd.f32 %v1010, %v1038
        %v1059 = vadd.f32 %v1011, %v1040
        %v1060 = vadd.f32 %v1012, %v1042
        %v1061 = vadd.f32 %v1013, %v1044
        %v1062 = vadd.f32 %v1014, %v1046
        %vm1063 = vcmask 7168
        %1064 = vst.msk [vmem:[#allocation3] sm:$0xff] %vm1063, %v1047
        %1065 = vst.msk [vmem:[#allocation3 + $0x8] sm:$0xff] %vm1063, %v1048
        %1066 = vst.msk [vmem:[#allocation3 + $0x10] sm:$0xff] %vm1063, %v1049
        %1067 = vst.msk [vmem:[#allocation3 + $0x18] sm:$0xff] %vm1063, %v1050
        %1068 = vst.msk [vmem:[#allocation3 + $0x20] sm:$0xff] %vm1063, %v1051
        %1069 = vst.msk [vmem:[#allocation3 + $0x28] sm:$0xff] %vm1063, %v1052
        %1070 = vst.msk [vmem:[#allocation3 + $0x30] sm:$0xff] %vm1063, %v1053
        %1071 = vst.msk [vmem:[#allocation3 + $0x38] sm:$0xff] %vm1063, %v1054
        %1072 = vst.msk [vmem:[#allocation3 + $0x40] sm:$0xff] %vm1063, %v1055
        %1073 = vst.msk [vmem:[#allocation3 + $0x48] sm:$0xff] %vm1063, %v1056
        %1074 = vst.msk [vmem:[#allocation3 + $0x50] sm:$0xff] %vm1063, %v1057
        %1075 = vst.msk [vmem:[#allocation3 + $0x58] sm:$0xff] %vm1063, %v1058
        %1076 = vst.msk [vmem:[#allocation3 + $0x60] sm:$0xff] %vm1063, %v1059
        %1077 = vst.msk [vmem:[#allocation3 + $0x68] sm:$0xff] %vm1063, %v1060
        %1078 = vst.msk [vmem:[#allocation3 + $0x70] sm:$0xff] %vm1063, %v1061
        %1079 = vst.msk [vmem:[#allocation3 + $0x78] sm:$0xff] %vm1063, %v1062
        %v1080 = vpack.c.bf16 %v954, %v952
        %v1081 = vpack.c.bf16 %v958, %v956
        %v1082 = vpack.c.bf16 %v962, %v960
        %v1083 = vpack.c.bf16 %v966, %v964
        %v1084 = vpack.c.bf16 %v970, %v968
        %v1085 = vpack.c.bf16 %v974, %v972
        %v1086 = vpack.c.bf16 %v978, %v976
        %v1087 = vpack.c.bf16 %v982, %v980
        %v1104 = vunpack.c.l.b16 %v582
        %v1105 = vunpack.c.l.b16 %v583
        %v1106 = vunpack.c.l.b16 %v584
        %v1107 = vunpack.c.l.b16 %v585
        %v1108 = vunpack.c.l.b16 %v586
        %v1109 = vunpack.c.l.b16 %v587
        %v1110 = vunpack.c.l.b16 %v588
        %v1111 = vunpack.c.l.b16 %v589
        %v1112 = vunpack.c.l.b16 %v590
        %v1113 = vunpack.c.l.b16 %v591
        %v1114 = vunpack.c.l.b16 %v592
        %v1115 = vunpack.c.l.b16 %v593
        %v1116 = vunpack.c.l.b16 %v594
        %v1117 = vunpack.c.l.b16 %v595
        %v1118 = vunpack.c.l.b16 %v596
        %v1119 = vunpack.c.l.b16 %v597
        %v1120 = vpack.c.b16 %v1105, %v1104
        %v1121 = vpack.c.b16 %v1107, %v1106
        %v1122 = vpack.c.b16 %v1109, %v1108
        %v1123 = vpack.c.b16 %v1111, %v1110
        %v1124 = vpack.c.b16 %v1113, %v1112
        %v1125 = vpack.c.b16 %v1115, %v1114
        %v1126 = vpack.c.b16 %v1117, %v1116
        %v1127 = vpack.c.b16 %v1119, %v1118
        %1136 = vmatpush.bf16.msra.mxu0 %v1127
        %1137 = vmatpush.bf16.msra.mxu0 %v1126
        %1138 = vmatpush.bf16.msra.mxu0 %v1125
        %1139 = vmatpush.bf16.msra.mxu0 %v1124
        %1140 = vmatpush.bf16.msra.mxu0 %v1123
        %1141 = vmatpush.bf16.msra.mxu0 %v1122
        %1142 = vmatpush.bf16.msra.mxu0 %v1121
        %1143 = vmatpush.bf16.msra.mxu0 %v1120
        %1144 = vmatmul.bf16.gmra.mxu0 %v1080
        %v1145 = vpop.f32.mrf.mxu0
        %v1146 = vadd.f32 0.0, %v1145
        %v1147 = vpop.f32.mrf.mxu0
        %v1148 = vadd.f32 0.0, %v1147
        %1149 = vmatmul.bf16.gmra.mxu0 %v1081
        %v1150 = vpop.f32.mrf.mxu0
        %v1151 = vadd.f32 0.0, %v1150
        %v1152 = vpop.f32.mrf.mxu0
        %v1153 = vadd.f32 0.0, %v1152
        %1154 = vmatmul.bf16.gmra.mxu0 %v1082
        %v1155 = vpop.f32.mrf.mxu0
        %v1156 = vadd.f32 0.0, %v1155
        %v1157 = vpop.f32.mrf.mxu0
        %v1158 = vadd.f32 0.0, %v1157
        %1159 = vmatmul.bf16.gmra.mxu0 %v1083
        %v1160 = vpop.f32.mrf.mxu0
        %v1161 = vadd.f32 0.0, %v1160
        %v1162 = vpop.f32.mrf.mxu0
        %v1163 = vadd.f32 0.0, %v1162
        %1164 = vmatmul.bf16.gmra.mxu0 %v1084
        %v1165 = vpop.f32.mrf.mxu0
        %v1166 = vadd.f32 0.0, %v1165
        %v1167 = vpop.f32.mrf.mxu0
        %v1168 = vadd.f32 0.0, %v1167
        %1169 = vmatmul.bf16.gmra.mxu0 %v1085
        %v1170 = vpop.f32.mrf.mxu0
        %v1171 = vadd.f32 0.0, %v1170
        %v1172 = vpop.f32.mrf.mxu0
        %v1173 = vadd.f32 0.0, %v1172
        %1174 = vmatmul.bf16.gmra.mxu0 %v1086
        %v1175 = vpop.f32.mrf.mxu0
        %v1176 = vadd.f32 0.0, %v1175
        %v1177 = vpop.f32.mrf.mxu0
        %v1178 = vadd.f32 0.0, %v1177
        %1179 = vmatmul.bf16.gmra.mxu0 %v1087
        %v1180 = vpop.f32.mrf.mxu0
        %v1181 = vadd.f32 0.0, %v1180
        %v1182 = vpop.f32.mrf.mxu0
        %v1183 = vadd.f32 0.0, %v1182
        %1184 = vdwg.mxu0
        %v1185 = vld [vmem:[#allocation4] sm:$0xff]
        %v1186 = vld [vmem:[#allocation4 + $0x8] sm:$0xff]
        %v1187 = vld [vmem:[#allocation4 + $0x10] sm:$0xff]
        %v1188 = vld [vmem:[#allocation4 + $0x18] sm:$0xff]
        %v1189 = vld [vmem:[#allocation4 + $0x20] sm:$0xff]
        %v1190 = vld [vmem:[#allocation4 + $0x28] sm:$0xff]
        %v1191 = vld [vmem:[#allocation4 + $0x30] sm:$0xff]
        %v1192 = vld [vmem:[#allocation4 + $0x38] sm:$0xff]
        %v1193 = vld [vmem:[#allocation4 + $0x40] sm:$0xff]
        %v1194 = vld [vmem:[#allocation4 + $0x48] sm:$0xff]
        %v1195 = vld [vmem:[#allocation4 + $0x50] sm:$0xff]
        %v1196 = vld [vmem:[#allocation4 + $0x58] sm:$0xff]
        %v1197 = vld [vmem:[#allocation4 + $0x60] sm:$0xff]
        %v1198 = vld [vmem:[#allocation4 + $0x68] sm:$0xff]
        %v1199 = vld [vmem:[#allocation4 + $0x70] sm:$0xff]
        %v1200 = vld [vmem:[#allocation4 + $0x78] sm:$0xff]
        %1202 = vset.pattern.permute.xlu0 0
        %1203 = vperm.xlu0 %1202, %v824
        %v1204 = vpop.permute.xlu0 %1203
        %1207 = vset.pattern.permute.xlu0 0
        %1208 = vperm.xlu0 %1207, %v826
        %v1209 = vpop.permute.xlu0 %1208
        %1212 = vset.pattern.permute.xlu0 0
        %1213 = vperm.xlu0 %1212, %v828
        %v1214 = vpop.permute.xlu0 %1213
        %1217 = vset.pattern.permute.xlu0 0
        %1218 = vperm.xlu0 %1217, %v830
        %v1219 = vpop.permute.xlu0 %1218
        %1222 = vset.pattern.permute.xlu0 0
        %1223 = vperm.xlu0 %1222, %v832
        %v1224 = vpop.permute.xlu0 %1223
        %1227 = vset.pattern.permute.xlu0 0
        %1228 = vperm.xlu0 %1227, %v834
        %v1229 = vpop.permute.xlu0 %1228
        %1232 = vset.pattern.permute.xlu0 0
        %1233 = vperm.xlu0 %1232, %v836
        %v1234 = vpop.permute.xlu0 %1233
        %1237 = vset.pattern.permute.xlu0 0
        %1238 = vperm.xlu0 %1237, %v838
        %v1239 = vpop.permute.xlu0 %1238
        %1242 = vset.pattern.permute.xlu0 0
        %1243 = vperm.xlu0 %1242, %v840
        %v1244 = vpop.permute.xlu0 %1243
        %1247 = vset.pattern.permute.xlu0 0
        %1248 = vperm.xlu0 %1247, %v842
        %v1249 = vpop.permute.xlu0 %1248
        %1252 = vset.pattern.permute.xlu0 0
        %1253 = vperm.xlu0 %1252, %v844
        %v1254 = vpop.permute.xlu0 %1253
        %1257 = vset.pattern.permute.xlu0 0
        %1258 = vperm.xlu0 %1257, %v846
        %v1259 = vpop.permute.xlu0 %1258
        %1262 = vset.pattern.permute.xlu0 0
        %1263 = vperm.xlu0 %1262, %v848
        %v1264 = vpop.permute.xlu0 %1263
        %1267 = vset.pattern.permute.xlu0 0
        %1268 = vperm.xlu0 %1267, %v850
        %v1269 = vpop.permute.xlu0 %1268
        %1272 = vset.pattern.permute.xlu0 0
        %1273 = vperm.xlu0 %1272, %v852
        %v1274 = vpop.permute.xlu0 %1273
        %1277 = vset.pattern.permute.xlu0 0
        %1278 = vperm.xlu0 %1277, %v854
        %v1279 = vpop.permute.xlu0 %1278
        %v1281 = vmul.f32 %v1204, %v1185
        %v1282 = vmul.f32 %v1209, %v1186
        %v1283 = vmul.f32 %v1214, %v1187
        %v1284 = vmul.f32 %v1219, %v1188
        %v1285 = vmul.f32 %v1224, %v1189
        %v1286 = vmul.f32 %v1229, %v1190
        %v1287 = vmul.f32 %v1234, %v1191
        %v1288 = vmul.f32 %v1239, %v1192
        %v1289 = vmul.f32 %v1244, %v1193
        %v1290 = vmul.f32 %v1249, %v1194
        %v1291 = vmul.f32 %v1254, %v1195
        %v1292 = vmul.f32 %v1259, %v1196
        %v1293 = vmul.f32 %v1264, %v1197
        %v1294 = vmul.f32 %v1269, %v1198
        %v1295 = vmul.f32 %v1274, %v1199
        %v1296 = vmul.f32 %v1279, %v1200
        %v1297 = vadd.f32 %v1281, %v1146
        %v1298 = vadd.f32 %v1282, %v1148
        %v1299 = vadd.f32 %v1283, %v1151
        %v1300 = vadd.f32 %v1284, %v1153
        %v1301 = vadd.f32 %v1285, %v1156
        %v1302 = vadd.f32 %v1286, %v1158
        %v1303 = vadd.f32 %v1287, %v1161
        %v1304 = vadd.f32 %v1288, %v1163
        %v1305 = vadd.f32 %v1289, %v1166
        %v1306 = vadd.f32 %v1290, %v1168
        %v1307 = vadd.f32 %v1291, %v1171
        %v1308 = vadd.f32 %v1292, %v1173
        %v1309 = vadd.f32 %v1293, %v1176
        %v1310 = vadd.f32 %v1294, %v1178
        %v1311 = vadd.f32 %v1295, %v1181
        %v1312 = vadd.f32 %v1296, %v1183
        %1313 = vst [vmem:[#allocation4] sm:$0xff] %v1297
        %1314 = vst [vmem:[#allocation4 + $0x8] sm:$0xff] %v1298
        %1315 = vst [vmem:[#allocation4 + $0x10] sm:$0xff] %v1299
        %1316 = vst [vmem:[#allocation4 + $0x18] sm:$0xff] %v1300
        %1317 = vst [vmem:[#allocation4 + $0x20] sm:$0xff] %v1301
        %1318 = vst [vmem:[#allocation4 + $0x28] sm:$0xff] %v1302
        %1319 = vst [vmem:[#allocation4 + $0x30] sm:$0xff] %v1303
        %1320 = vst [vmem:[#allocation4 + $0x38] sm:$0xff] %v1304
        %1321 = vst [vmem:[#allocation4 + $0x40] sm:$0xff] %v1305
        %1322 = vst [vmem:[#allocation4 + $0x48] sm:$0xff] %v1306
        %1323 = vst [vmem:[#allocation4 + $0x50] sm:$0xff] %v1307
        %1324 = vst [vmem:[#allocation4 + $0x58] sm:$0xff] %v1308
        %1325 = vst [vmem:[#allocation4 + $0x60] sm:$0xff] %v1309
        %1326 = vst [vmem:[#allocation4 + $0x68] sm:$0xff] %v1310
        %1327 = vst [vmem:[#allocation4 + $0x70] sm:$0xff] %v1311
        %1328 = vst [vmem:[#allocation4 + $0x78] sm:$0xff] %v1312
        %1329 = vst.msk [vmem:[#allocation2] sm:$0xff] %vm1063, %v791
        %1330 = vst.msk [vmem:[#allocation2 + $0x8] sm:$0xff] %vm1063, %v792
        %1331 = vst.msk [vmem:[#allocation2 + $0x10] sm:$0xff] %vm1063, %v793
        %1332 = vst.msk [vmem:[#allocation2 + $0x18] sm:$0xff] %vm1063, %v794
        %1333 = vst.msk [vmem:[#allocation2 + $0x20] sm:$0xff] %vm1063, %v795
        %1334 = vst.msk [vmem:[#allocation2 + $0x28] sm:$0xff] %vm1063, %v796
        %1335 = vst.msk [vmem:[#allocation2 + $0x30] sm:$0xff] %vm1063, %v797
        %1336 = vst.msk [vmem:[#allocation2 + $0x38] sm:$0xff] %vm1063, %v798
        %1337 = vst.msk [vmem:[#allocation2 + $0x40] sm:$0xff] %vm1063, %v799
        %1338 = vst.msk [vmem:[#allocation2 + $0x48] sm:$0xff] %vm1063, %v800
        %1339 = vst.msk [vmem:[#allocation2 + $0x50] sm:$0xff] %vm1063, %v801
        %1340 = vst.msk [vmem:[#allocation2 + $0x58] sm:$0xff] %vm1063, %v802
        %1341 = vst.msk [vmem:[#allocation2 + $0x60] sm:$0xff] %vm1063, %v803
        %1342 = vst.msk [vmem:[#allocation2 + $0x68] sm:$0xff] %vm1063, %v804
        %1343 = vst.msk [vmem:[#allocation2 + $0x70] sm:$0xff] %vm1063, %v805
        %1344 = vst.msk [vmem:[#allocation2 + $0x78] sm:$0xff] %vm1063, %v806
        %p1345 = scmp.eq.s32.totalorder %s24, 1
        // Predicated region
        $region90: #{nonlocal_forward_pallas.1} parent=80 // pred_check
          %p1346 = pneg %p1345
        $region91: #{nonlocal_forward_pallas.1} parent=80 // pred_check_branch
          %1348 = sbr.rel (%p1346) target = $region93
        $region92: #{nonlocal_forward_pallas.1} parent=80 // pred_region
          %v1349 = vld [vmem:[#allocation3] sm:$0xff]
          %v1350 = vld [vmem:[#allocation3 + $0x8] sm:$0xff]
          %v1351 = vld [vmem:[#allocation3 + $0x10] sm:$0xff]
          %v1352 = vld [vmem:[#allocation3 + $0x18] sm:$0xff]
          %v1353 = vld [vmem:[#allocation3 + $0x20] sm:$0xff]
          %v1354 = vld [vmem:[#allocation3 + $0x28] sm:$0xff]
          %v1355 = vld [vmem:[#allocation3 + $0x30] sm:$0xff]
          %v1356 = vld [vmem:[#allocation3 + $0x38] sm:$0xff]
          %v1357 = vld [vmem:[#allocation3 + $0x40] sm:$0xff]
          %v1358 = vld [vmem:[#allocation3 + $0x48] sm:$0xff]
          %v1359 = vld [vmem:[#allocation3 + $0x50] sm:$0xff]
          %v1360 = vld [vmem:[#allocation3 + $0x58] sm:$0xff]
          %v1361 = vld [vmem:[#allocation3 + $0x60] sm:$0xff]
          %v1362 = vld [vmem:[#allocation3 + $0x68] sm:$0xff]
          %v1363 = vld [vmem:[#allocation3 + $0x70] sm:$0xff]
          %v1364 = vld [vmem:[#allocation3 + $0x78] sm:$0xff]
          %v1365 = vrcp.pop %v1349
          %v1366 = vrcp.pop %v1350
          %v1367 = vrcp.pop %v1351
          %v1368 = vrcp.pop %v1352
          %v1369 = vrcp.pop %v1353
          %v1370 = vrcp.pop %v1354
          %v1371 = vrcp.pop %v1355
          %v1372 = vrcp.pop %v1356
          %v1373 = vrcp.pop %v1357
          %v1374 = vrcp.pop %v1358
          %v1375 = vrcp.pop %v1359
          %v1376 = vrcp.pop %v1360
          %v1377 = vrcp.pop %v1361
          %v1378 = vrcp.pop %v1362
          %v1379 = vrcp.pop %v1363
          %v1380 = vrcp.pop %v1364
          %v1381 = vld [vmem:[#allocation4] sm:$0xff]
          %v1382 = vld [vmem:[#allocation4 + $0x8] sm:$0xff]
          %v1383 = vld [vmem:[#allocation4 + $0x10] sm:$0xff]
          %v1384 = vld [vmem:[#allocation4 + $0x18] sm:$0xff]
          %v1385 = vld [vmem:[#allocation4 + $0x20] sm:$0xff]
          %v1386 = vld [vmem:[#allocation4 + $0x28] sm:$0xff]
          %v1387 = vld [vmem:[#allocation4 + $0x30] sm:$0xff]
          %v1388 = vld [vmem:[#allocation4 + $0x38] sm:$0xff]
          %v1389 = vld [vmem:[#allocation4 + $0x40] sm:$0xff]
          %v1390 = vld [vmem:[#allocation4 + $0x48] sm:$0xff]
          %v1391 = vld [vmem:[#allocation4 + $0x50] sm:$0xff]
          %v1392 = vld [vmem:[#allocation4 + $0x58] sm:$0xff]
          %v1393 = vld [vmem:[#allocation4 + $0x60] sm:$0xff]
          %v1394 = vld [vmem:[#allocation4 + $0x68] sm:$0xff]
          %v1395 = vld [vmem:[#allocation4 + $0x70] sm:$0xff]
          %v1396 = vld [vmem:[#allocation4 + $0x78] sm:$0xff]
          %1398 = vset.pattern.permute.xlu0 0
          %1399 = vperm.xlu0 %1398, %v1365
          %v1400 = vpop.permute.xlu0 %1399
          %1403 = vset.pattern.permute.xlu0 0
          %1404 = vperm.xlu0 %1403, %v1366
          %v1405 = vpop.permute.xlu0 %1404
          %1408 = vset.pattern.permute.xlu0 0
          %1409 = vperm.xlu0 %1408, %v1367
          %v1410 = vpop.permute.xlu0 %1409
          %1413 = vset.pattern.permute.xlu0 0
          %1414 = vperm.xlu0 %1413, %v1368
          %v1415 = vpop.permute.xlu0 %1414
          %1418 = vset.pattern.permute.xlu0 0
          %1419 = vperm.xlu0 %1418, %v1369
          %v1420 = vpop.permute.xlu0 %1419
          %1423 = vset.pattern.permute.xlu0 0
          %1424 = vperm.xlu0 %1423, %v1370
          %v1425 = vpop.permute.xlu0 %1424
          %1428 = vset.pattern.permute.xlu0 0
          %1429 = vperm.xlu0 %1428, %v1371
          %v1430 = vpop.permute.xlu0 %1429
          %1433 = vset.pattern.permute.xlu0 0
          %1434 = vperm.xlu0 %1433, %v1372
          %v1435 = vpop.permute.xlu0 %1434
          %1438 = vset.pattern.permute.xlu0 0
          %1439 = vperm.xlu0 %1438, %v1373
          %v1440 = vpop.permute.xlu0 %1439
          %1443 = vset.pattern.permute.xlu0 0
          %1444 = vperm.xlu0 %1443, %v1374
          %v1445 = vpop.permute.xlu0 %1444
          %1448 = vset.pattern.permute.xlu0 0
          %1449 = vperm.xlu0 %1448, %v1375
          %v1450 = vpop.permute.xlu0 %1449
          %1453 = vset.pattern.permute.xlu0 0
          %1454 = vperm.xlu0 %1453, %v1376
          %v1455 = vpop.permute.xlu0 %1454
          %1458 = vset.pattern.permute.xlu0 0
          %1459 = vperm.xlu0 %1458, %v1377
          %v1460 = vpop.permute.xlu0 %1459
          %1463 = vset.pattern.permute.xlu0 0
          %1464 = vperm.xlu0 %1463, %v1378
          %v1465 = vpop.permute.xlu0 %1464
          %1468 = vset.pattern.permute.xlu0 0
          %1469 = vperm.xlu0 %1468, %v1379
          %v1470 = vpop.permute.xlu0 %1469
          %1473 = vset.pattern.permute.xlu0 0
          %1474 = vperm.xlu0 %1473, %v1380
          %v1475 = vpop.permute.xlu0 %1474
          %v1477 = vmul.f32 %v1381, %v1400
          %v1478 = vmul.f32 %v1382, %v1405
          %v1479 = vmul.f32 %v1383, %v1410
          %v1480 = vmul.f32 %v1384, %v1415
          %v1481 = vmul.f32 %v1385, %v1420
          %v1482 = vmul.f32 %v1386, %v1425
          %v1483 = vmul.f32 %v1387, %v1430
          %v1484 = vmul.f32 %v1388, %v1435
          %v1485 = vmul.f32 %v1389, %v1440
          %v1486 = vmul.f32 %v1390, %v1445
          %v1487 = vmul.f32 %v1391, %v1450
          %v1488 = vmul.f32 %v1392, %v1455
          %v1489 = vmul.f32 %v1393, %v1460
          %v1490 = vmul.f32 %v1394, %v1465
          %v1491 = vmul.f32 %v1395, %v1470
          %v1492 = vmul.f32 %v1396, %v1475
          %v1493 = vpack.c.bf16 %v1478, %v1477
          %v1494 = vpack.c.bf16 %v1480, %v1479
          %v1495 = vpack.c.bf16 %v1482, %v1481
          %v1496 = vpack.c.bf16 %v1484, %v1483
          %v1497 = vpack.c.bf16 %v1486, %v1485
          %v1498 = vpack.c.bf16 %v1488, %v1487
          %v1499 = vpack.c.bf16 %v1490, %v1489
          %v1500 = vpack.c.bf16 %v1492, %v1491
          %v1501 = vld [vmem:[%s4] sm:$0xf]
          %v1502 = vld [vmem:[%s4 + $0x4] sm:$0xf]
          %v1503 = vld [vmem:[%s4 + $0x8] sm:$0xf]
          %v1504 = vld [vmem:[%s4 + $0xc] sm:$0xf]
          %v1505 = vld [vmem:[%s4 + $0x10] sm:$0xf]
          %v1506 = vld [vmem:[%s4 + $0x14] sm:$0xf]
          %v1507 = vld [vmem:[%s4 + $0x18] sm:$0xf]
          %v1508 = vld [vmem:[%s4 + $0x1c] sm:$0xf]
          %v1509 = vld [vmem:[%s4 + $0x20] sm:$0xf]
          %v1510 = vld [vmem:[%s4 + $0x24] sm:$0xf]
          %v1511 = vld [vmem:[%s4 + $0x28] sm:$0xf]
          %v1512 = vld [vmem:[%s4 + $0x2c] sm:$0xf]
          %v1513 = vld [vmem:[%s4 + $0x30] sm:$0xf]
          %v1514 = vld [vmem:[%s4 + $0x34] sm:$0xf]
          %v1515 = vld [vmem:[%s4 + $0x38] sm:$0xf]
          %v1516 = vld [vmem:[%s4 + $0x3c] sm:$0xf]
          %v1517 = vld [vmem:[%s5] sm:$0x1]
          %v1519 = vperm.slane %v1517, 0
          %v1537 = vunpack.c.l.b16 %v1501
          %v1538 = vunpack.c.l.b16 %v1502
          %v1539 = vunpack.c.l.b16 %v1503
          %v1540 = vunpack.c.l.b16 %v1504
          %v1541 = vunpack.c.l.b16 %v1505
          %v1542 = vunpack.c.l.b16 %v1506
          %v1543 = vunpack.c.l.b16 %v1507
          %v1544 = vunpack.c.l.b16 %v1508
          %v1545 = vunpack.c.l.b16 %v1509
          %v1546 = vunpack.c.l.b16 %v1510
          %v1547 = vunpack.c.l.b16 %v1511
          %v1548 = vunpack.c.l.b16 %v1512
          %v1549 = vunpack.c.l.b16 %v1513
          %v1550 = vunpack.c.l.b16 %v1514
          %v1551 = vunpack.c.l.b16 %v1515
          %v1552 = vunpack.c.l.b16 %v1516
          %v1553 = vpack.c.b16 %v1538, %v1537
          %v1554 = vpack.c.b16 %v1540, %v1539
          %v1555 = vpack.c.b16 %v1542, %v1541
          %v1556 = vpack.c.b16 %v1544, %v1543
          %v1557 = vpack.c.b16 %v1546, %v1545
          %v1558 = vpack.c.b16 %v1548, %v1547
          %v1559 = vpack.c.b16 %v1550, %v1549
          %v1560 = vpack.c.b16 %v1552, %v1551
          %1569 = vmatpush.bf16.msra.mxu0 %v1560
          %1570 = vmatpush.bf16.msra.mxu0 %v1559
          %1571 = vmatpush.bf16.msra.mxu0 %v1558
          %1572 = vmatpush.bf16.msra.mxu0 %v1557
          %1573 = vmatpush.bf16.msra.mxu0 %v1556
          %1574 = vmatpush.bf16.msra.mxu0 %v1555
          %1575 = vmatpush.bf16.msra.mxu0 %v1554
          %1576 = vmatpush.bf16.msra.mxu0 %v1553
          %1577 = vmatmul.bf16.gmra.mxu0 %v1493
          %v1578 = vpop.f32.mrf.mxu0
          %v1579 = vadd.f32 %v1519, %v1578
          %v1580 = vpop.f32.mrf.mxu0
          %v1581 = vadd.f32 %v1519, %v1580
          %1582 = vmatmul.bf16.gmra.mxu0 %v1494
          %v1583 = vpop.f32.mrf.mxu0
          %v1584 = vadd.f32 %v1519, %v1583
          %v1585 = vpop.f32.mrf.mxu0
          %v1586 = vadd.f32 %v1519, %v1585
          %1587 = vmatmul.bf16.gmra.mxu0 %v1495
          %v1588 = vpop.f32.mrf.mxu0
          %v1589 = vadd.f32 %v1519, %v1588
          %v1590 = vpop.f32.mrf.mxu0
          %v1591 = vadd.f32 %v1519, %v1590
          %1592 = vmatmul.bf16.gmra.mxu0 %v1496
          %v1593 = vpop.f32.mrf.mxu0
          %v1594 = vadd.f32 %v1519, %v1593
          %v1595 = vpop.f32.mrf.mxu0
          %v1596 = vadd.f32 %v1519, %v1595
          %1597 = vmatmul.bf16.gmra.mxu0 %v1497
          %v1598 = vpop.f32.mrf.mxu0
          %v1599 = vadd.f32 %v1519, %v1598
          %v1600 = vpop.f32.mrf.mxu0
          %v1601 = vadd.f32 %v1519, %v1600
          %1602 = vmatmul.bf16.gmra.mxu0 %v1498
          %v1603 = vpop.f32.mrf.mxu0
          %v1604 = vadd.f32 %v1519, %v1603
          %v1605 = vpop.f32.mrf.mxu0
          %v1606 = vadd.f32 %v1519, %v1605
          %1607 = vmatmul.bf16.gmra.mxu0 %v1499
          %v1608 = vpop.f32.mrf.mxu0
          %v1609 = vadd.f32 %v1519, %v1608
          %v1610 = vpop.f32.mrf.mxu0
          %v1611 = vadd.f32 %v1519, %v1610
          %1612 = vmatmul.bf16.gmra.mxu0 %v1500
          %v1613 = vpop.f32.mrf.mxu0
          %v1614 = vadd.f32 %v1519, %v1613
          %v1615 = vpop.f32.mrf.mxu0
          %v1616 = vadd.f32 %v1519, %v1615
          %1617 = vdwg.mxu0
          %v1618 = vld [vmem:[%s485] sm:$0xff]
          %v1619 = vld [vmem:[%s485 + $0x8] sm:$0xff]
          %v1620 = vld [vmem:[%s485 + $0x10] sm:$0xff]
          %v1621 = vld [vmem:[%s485 + $0x18] sm:$0xff]
          %v1622 = vld [vmem:[%s485 + $0x20] sm:$0xff]
          %v1623 = vld [vmem:[%s485 + $0x28] sm:$0xff]
          %v1624 = vld [vmem:[%s485 + $0x30] sm:$0xff]
          %v1625 = vld [vmem:[%s485 + $0x38] sm:$0xff]
          %v1626 = vld [vmem:[%s485 + $0x40] sm:$0xff]
          %v1627 = vld [vmem:[%s485 + $0x48] sm:$0xff]
          %v1628 = vld [vmem:[%s485 + $0x50] sm:$0xff]
          %v1629 = vld [vmem:[%s485 + $0x58] sm:$0xff]
          %v1630 = vld [vmem:[%s485 + $0x60] sm:$0xff]
          %v1631 = vld [vmem:[%s485 + $0x68] sm:$0xff]
          %v1632 = vld [vmem:[%s485 + $0x70] sm:$0xff]
          %v1633 = vld [vmem:[%s485 + $0x78] sm:$0xff]
          %v1634 = vadd.f32 %v1579, %v1618
          %v1635 = vadd.f32 %v1581, %v1619
          %v1636 = vadd.f32 %v1584, %v1620
          %v1637 = vadd.f32 %v1586, %v1621
          %v1638 = vadd.f32 %v1589, %v1622
          %v1639 = vadd.f32 %v1591, %v1623
          %v1640 = vadd.f32 %v1594, %v1624
          %v1641 = vadd.f32 %v1596, %v1625
          %v1642 = vadd.f32 %v1599, %v1626
          %v1643 = vadd.f32 %v1601, %v1627
          %v1644 = vadd.f32 %v1604, %v1628
          %v1645 = vadd.f32 %v1606, %v1629
          %v1646 = vadd.f32 %v1609, %v1630
          %v1647 = vadd.f32 %v1611, %v1631
          %v1648 = vadd.f32 %v1614, %v1632
          %v1649 = vadd.f32 %v1616, %v1633
          %1650 = vst [vmem:[%s495] sm:$0xff] %v1634
          %1651 = vst [vmem:[%s495 + $0x8] sm:$0xff] %v1635
          %1652 = vst [vmem:[%s495 + $0x10] sm:$0xff] %v1636
          %1653 = vst [vmem:[%s495 + $0x18] sm:$0xff] %v1637
          %1654 = vst [vmem:[%s495 + $0x20] sm:$0xff] %v1638
          %1655 = vst [vmem:[%s495 + $0x28] sm:$0xff] %v1639
          %1656 = vst [vmem:[%s495 + $0x30] sm:$0xff] %v1640
          %1657 = vst [vmem:[%s495 + $0x38] sm:$0xff] %v1641
          %1658 = vst [vmem:[%s495 + $0x40] sm:$0xff] %v1642
          %1659 = vst [vmem:[%s495 + $0x48] sm:$0xff] %v1643
          %1660 = vst [vmem:[%s495 + $0x50] sm:$0xff] %v1644
          %1661 = vst [vmem:[%s495 + $0x58] sm:$0xff] %v1645
          %1662 = vst [vmem:[%s495 + $0x60] sm:$0xff] %v1646
          %1663 = vst [vmem:[%s495 + $0x68] sm:$0xff] %v1647
          %1664 = vst [vmem:[%s495 + $0x70] sm:$0xff] %v1648
          %1665 = vst [vmem:[%s495 + $0x78] sm:$0xff] %v1649
        $region93: #{nonlocal_forward_pallas.1} parent=80 // pred_fallthru
          _
        %s1666 = smul.u32 16, %s23
        %p1667 = scmp.lt.s32.totalorder %s22, 1
        %s1668 = scalar_select %p1667, %s22, 1
        %p1669 = scmp.lt.s32.totalorder %s1666, 31
        %s1670 = scalar_select %p1669, %s1666, 31
        %s1671 = smul.addr %s1668, 32
        %s1672 = sadd.s32 %s1670, %s1671
        %s1673 = smul.addr %s1672, 8
        %s1674 = scalar_lea.vmem %s6, %s1673
        // Predicated region
        $region94: #{nonlocal_forward_pallas.1} parent=80 // pred_check
          %p1675 = pneg %p210
        $region95: #{nonlocal_forward_pallas.1} parent=80 // pred_check_branch
          %1677 = sbr.rel (%p1675) target = $region97
        $region96: #{nonlocal_forward_pallas.1} parent=80 // pred_region
          %s1678 = smul.u32 16, %s23
        $region97: #{nonlocal_forward_pallas.1} parent=80 // pred_fallthru
          _
      $region81: #{nonlocal_forward_pallas.1} parent=5 // pred_fallthru
        _
      %p1679 = scmp.le.s32.totalorder 2, %s12
      // Predicated region
      $region98: #{nonlocal_forward_pallas.1} parent=5 // pred_check
        %p1680 = pneg %p1679
      $region99: #{nonlocal_forward_pallas.1} parent=5 // pred_check_branch
        %1682 = sbr.rel (%p1680) target = $region101
      $region100: #{nonlocal_forward_pallas.1} parent=5 // pred_region
        %s1683 = ssub.s32 %s12, 2
        // Predicated region
        $region102: #{nonlocal_forward_pallas.1} parent=100 // pred_check
          %p1684 = pneg %p216
        $region103: #{nonlocal_forward_pallas.1} parent=100 // pred_check_branch
          %1686 = sbr.rel (%p1684) target = $region105
        $region104: #{nonlocal_forward_pallas.1} parent=100 // pred_region
          %s1687 = smul.u32 16, %s26
          %p1688 = scmp.lt.s32.totalorder %s25, 1
          %s1689 = scalar_select %p1688, %s25, 1
          %p1690 = scmp.lt.s32.totalorder %s1687, 31
          %s1691 = scalar_select %p1690, %s1687, 31
          %s1692 = smul.addr %s1689, 32
          %s1693 = sadd.s32 %s1691, %s1692
          %s1694 = smul.addr %s1693, 8
          %s1695 = scalar_lea.vmem %s6, %s1694
        $region105: #{nonlocal_forward_pallas.1} parent=100 // pred_fallthru
          _
      $region101: #{nonlocal_forward_pallas.1} parent=5 // pred_fallthru
        _
    $region6: #{nonlocal_forward_pallas.1} parent=1 // loop_footer
      %s16 = sadd.s32 1, %s12
    $region7: #{nonlocal_forward_pallas.1} parent=1 // loop_footer_branch
      %11 = sbr.rel target = $region3
    $region8: #{nonlocal_forward_pallas.1} parent=1 // loop_exit
      _

</llo_original>
